<compile_context>
chip_gen: v5e
topology: v5e:2x2
jax: 0.10.0
libtpu: 0.0.40
codegen_flags: <defaults>
</compile_context>

<pallas_src>
import functools

import numpy as np
import jax
import jax.numpy as jnp
from jax.experimental import pallas as pl
from jax.experimental.pallas import tpu as pltpu

LANE = 128


# ----------------------------------------------------------------------------
# small helpers (host-side, used only at prep time)
# ----------------------------------------------------------------------------
def _round_up(x, m):
    return (x + m - 1) // m * m


def _pad2d(a, rows, cols):
    a = np.asarray(a, np.float32)
    out = np.zeros((rows, cols), np.float32)
    out[: a.shape[0], : a.shape[1]] = a
    return out


def _conv1d_dense(w, L_in, stride, pad):
    """PyTorch Conv1d weight (C_out, C_in, k), bias-free -> dense map from
    channels-last flattened input (li*C_in + ci) to channels-last flattened
    output (lo*C_out + co)."""
    w = np.asarray(w, np.float32)
    C_out, C_in, k = w.shape
    L_out = (L_in + 2 * pad - k) // stride + 1
    A = np.zeros((L_in * C_in, L_out * C_out), np.float32)
    for lo in range(L_out):
        for j in range(k):
            li = lo * stride + j - pad
            if 0 <= li < L_in:
                A[li * C_in:(li + 1) * C_in, lo * C_out:(lo + 1) * C_out] += w[:, :, j].T
    return A, L_out


def _convT1d_dense(w, L_in, stride, pad):
    """PyTorch ConvTranspose1d weight (C_in, C_out, k), bias-free -> dense
    channels-last map (no zero-stuffing, no wasted MXU work on stuffed zeros)."""
    w = np.asarray(w, np.float32)
    C_in, C_out, k = w.shape
    L_out = (L_in - 1) * stride - 2 * pad + k
    A = np.zeros((L_in * C_in, L_out * C_out), np.float32)
    for li in range(L_in):
        for j in range(k):
            lo = li * stride + j - pad
            if 0 <= lo < L_out:
                A[li * C_in:(li + 1) * C_in, lo * C_out:(lo + 1) * C_out] += w[:, :, j]
    return A, L_out


def _bn_cols(gamma, beta, mean, var, L, eps=1e-5):
    """BatchNorm1d (eval) folded to per-column affine over channels-last columns
    (column index = l*C + c)."""
    gamma, beta, mean, var = (np.asarray(t, np.float32) for t in (gamma, beta, mean, var))
    scale = gamma / np.sqrt(var + eps)
    shift = beta - mean * scale
    return np.tile(scale, L), np.tile(shift, L)


def _linear_in_cl(w_torch, C, L):
    """Linear weight (out, C*L) expecting PyTorch channel-major flatten (c*L + l)
    -> (L*C, out) consuming the kernel's channels-last flatten (l*C + c)."""
    w = np.asarray(w_torch, np.float32)
    out = w.shape[0]
    return w.reshape(out, C, L).transpose(2, 1, 0).reshape(L * C, out)


def _linear_out_cl(w_torch, b_torch, C, L):
    """Decoder Linear weight (C*L, latent) whose output is reshaped channel-major
    -> (latent, L*C) producing channels-last columns (l*C + c), bias likewise."""
    w = np.asarray(w_torch, np.float32)
    latent = w.shape[1]
    Wd = w.reshape(C, L, latent).transpose(2, 1, 0).reshape(latent, L * C)
    b = np.asarray(b_torch, np.float32).reshape(C, L).T.reshape(L * C)
    return Wd, b


# ----------------------------------------------------------------------------
# the single fused VAE kernel
# ----------------------------------------------------------------------------
def _vae_kernel(x_ref, eps_ref,
                a1_ref, s1_ref, t1_ref,
                a2_ref,
                a3_ref, s2_ref, t2_ref,
                wlat_ref, blat_ref,
                wr1_ref, br1_ref,
                wr2_ref, br2_ref,
                wd_ref, bd_ref,
                b1m_ref, s3_ref, t3_ref,
                b2m_ref, s4_ref, t4_ref,
                b3m_ref,
                out_ref, *, latp, p6, pd3):
    def leaky(v):
        return jnp.where(v >= 0, v, 0.01 * v)

    def sigmoid(v):
        return pl.reciprocal(1.0 + jnp.exp(-v), approx=True)

    def mm(lhs, w_ref):
        return jnp.dot(lhs.astype(jnp.bfloat16), w_ref[...],
                       preferred_element_type=jnp.float32)

    x = x_ref[...]

    # ----- encoder -----
    h = mm(x, a1_ref)                                        # Conv1d(1 -> C1)
    h = leaky(h) * s1_ref[...] + t1_ref[...]                 # LeakyReLU -> BN -> Dropout(id)
    h = leaky(mm(h, a2_ref))                                 # Conv1d(C1 -> C2) -> LeakyReLU
    h = leaky(mm(h, a3_ref) * s2_ref[...] + t2_ref[...])     # Conv1d -> BN -> LeakyReLU (+Flatten)

    # ----- latent heads (fused z_mean|z_log_var) + reparameterize -----
    y = mm(h, wlat_ref) + blat_ref[...]
    mu = y[:, :latp]
    lv = y[:, latp:]
    z = mu + eps_ref[...] * jnp.exp(0.5 * lv)

    # ----- regression head: Linear -> Linear -> Sigmoid -----
    r = mm(z, wr1_ref) + br1_ref[...]
    freq = sigmoid(mm(r, wr2_ref) + br2_ref[...])

    # ----- decoder -----
    d = mm(z, wd_ref) + bd_ref[...]                           # Linear -> (Reshape folded)
    d = leaky(mm(d, b1m_ref) * s3_ref[...] + t3_ref[...])     # ConvT -> BN -> LeakyReLU
    d = leaky(mm(d, b2m_ref) * s4_ref[...] + t4_ref[...])     # ConvT -> BN -> LeakyReLU
    d = sigmoid(leaky(mm(d, b3m_ref)))                        # ConvT -> LeakyReLU -> Trim -> Sigmoid

    # single lane-dense output slab: [z_mean | z_log_var | z | freq | decoded]
    out_ref[:, 0 * latp:1 * latp] = mu
    out_ref[:, 1 * latp:2 * latp] = lv
    out_ref[:, 2 * latp:3 * latp] = z
    out_ref[:, 3 * latp:3 * latp + p6] = freq
    out_ref[:, 3 * latp + p6:3 * latp + p6 + pd3] = d


# ----------------------------------------------------------------------------
# one-time weight packing (numpy, OUTSIDE jit)
# ----------------------------------------------------------------------------
def prepare_weights(params, *, num_hiddens, kernel_size, data_len, latent_dim):
    C2 = num_hiddens
    C1 = num_hiddens // 2
    K, k2, k3 = kernel_size, kernel_size // 2, kernel_size // 4
    L0 = data_len

    # convolutions lowered to dense channels-last matrices
    A1, L1 = _conv1d_dense(params["enc_w1"], L0, 2, K // 2 - 1)
    A2, L2 = _conv1d_dense(params["enc_w2"], L1, 2, k2 // 2 - 1)
    A3, L3 = _conv1d_dense(params["enc_w3"], L2, 2, k3 // 2 - 1)
    assert L3 == data_len // 8

    B1, Ld1 = _convT1d_dense(params["dt1_w"], L3, 2, k3 // 2 - 1)
    B2, Ld2 = _convT1d_dense(params["dt2_w"], Ld1, 2, k2 // 2 - 1)
    B3, Ld3 = _convT1d_dense(params["dt3_w"], Ld2, 2, K // 2 - 1)
    assert Ld3 >= data_len

    # BatchNorm (eval) folded to per-column affines
    s1, t1 = _bn_cols(*params["bn1"], L=L1)
    s2, t2 = _bn_cols(*params["bn2"], L=L3)
    s3, t3 = _bn_cols(*params["bn3"], L=Ld1)
    s4, t4 = _bn_cols(*params["bn4"], L=Ld2)

    # Linear layers permuted to the kernel's channels-last flattening
    Wzm = _linear_in_cl(params["zm_w"], C2, L3)
    Wzv = _linear_in_cl(params["zv_w"], C2, L3)
    Wr1 = np.asarray(params["r1_w"], np.float32).T
    Wr2 = np.asarray(params["r2_w"], np.float32).T
    Wd, bd = _linear_out_cl(params["dl_w"], params["dl_b"], C2, L3)

    H = Wr1.shape[1]
    D0, D1, D2, D3 = L0 * 1, L1 * C1, L2 * C2, L3 * C2
    Dd1, Dd2, Dd3 = Ld1 * C2, Ld2 * C1, Ld3 * 1
    P0, P1, P2, P3 = (_round_up(d, LANE) for d in (D0, D1, D2, D3))
    Pd1, Pd2, Pd3 = (_round_up(d, LANE) for d in (Dd1, Dd2, Dd3))
    PL, PH, P6 = _round_up(latent_dim, LANE), _round_up(H, LANE), _round_up(6, LANE)

    def m(a, r, c):   # bf16 padded weight matrix (zero padding => no cross-talk)
        return jnp.asarray(_pad2d(a, r, c), jnp.bfloat16)

    def v(a, c):      # f32 padded per-column row vector
        return jnp.asarray(_pad2d(np.asarray(a, np.float32).reshape(1, -1), 1, c),
                           jnp.float32)

    # merged z_mean / z_log_var head (lane-aligned halves)
    wlat = np.zeros((P3, 2 * PL), np.float32)
    wlat[:D3, :latent_dim] = Wzm
    wlat[:D3, PL:PL + latent_dim] = Wzv
    blat = np.zeros((1, 2 * PL), np.float32)
    blat[0, :latent_dim] = np.asarray(params["zm_b"], np.float32)
    blat[0, PL:PL + latent_dim] = np.asarray(params["zv_b"], np.float32)

    weights = (
        m(A1, P0, P1), v(s1, P1), v(t1, P1),
        m(A2, P1, P2),
        m(A3, P2, P3), v(s2, P3), v(t2, P3),
        jnp.asarray(wlat, jnp.bfloat16), jnp.asarray(blat, jnp.float32),
        m(Wr1, PL, PH), v(params["r1_b"], PH),
        m(Wr2, PH, P6), v(params["r2_b"], P6),
        m(Wd, PL, P3), v(bd, P3),
        m(B1, P3, Pd1), v(s3, Pd1), v(t3, Pd1),
        m(B2, Pd1, Pd2), v(s4, Pd2), v(t4, Pd2),
        m(B3, Pd2, Pd3),
    )
    dims = dict(P0=P0, PL=PL, P6=P6, Pd3=Pd3,
                latent=latent_dim, data_len=data_len,
                OUTW=3 * PL + P6 + Pd3)
    return weights, dims


# ----------------------------------------------------------------------------
# jitted forward (single pallas_call, batch-tiled 1-D "parallel" grid)
# ----------------------------------------------------------------------------
def make_vae_forward(weights, dims):
    P0, PL, P6, Pd3 = dims["P0"], dims["PL"], dims["P6"], dims["Pd3"]
    latent, data_len, OUTW = dims["latent"], dims["data_len"], dims["OUTW"]

    kernel = functools.partial(_vae_kernel, latp=PL, p6=P6, pd3=Pd3)
    w_specs = [pl.BlockSpec(w.shape, lambda i: (0, 0)) for w in weights]

    def forward(x_ncl, key):
        Nb = x_ncl.shape[0]
        TM = 128 if Nb > 128 else _round_up(Nb, 8)
        MP = _round_up(Nb, TM)

        xf = x_ncl.astype(jnp.float32).reshape(Nb, -1)            # C_in == 1
        xp = jnp.zeros((MP, P0), jnp.float32).at[:Nb, :data_len].set(xf)
        eps = jax.random.normal(key, (Nb, latent), jnp.float32)
        ep = jnp.zeros((MP, PL), jnp.float32).at[:Nb, :latent].set(eps)

        out = pl.pallas_call(
            kernel,
            out_shape=jax.ShapeDtypeStruct((MP, OUTW), jnp.float32),
            grid=(MP // TM,),
            in_specs=[pl.BlockSpec((TM, P0), lambda i: (i, 0)),
                      pl.BlockSpec((TM, PL), lambda i: (i, 0))] + w_specs,
            out_specs=pl.BlockSpec((TM, OUTW), lambda i: (i, 0)),
            compiler_params=pltpu.CompilerParams(
                dimension_semantics=("parallel",)),
        )(xp, ep, *weights)

        z_mean    = out[:Nb, 0 * PL:0 * PL + latent]
        z_log_var = out[:Nb, 1 * PL:1 * PL + latent]
        encoded   = out[:Nb, 2 * PL:2 * PL + latent]
        freq      = out[:Nb, 3 * PL:3 * PL + 6]
        decoded   = out[:Nb, 3 * PL + P6:3 * PL + P6 + data_len].reshape(Nb, 1, data_len)
        return encoded, z_mean, z_log_var, freq, decoded

    return jax.jit(forward)


# ----------------------------------------------------------------------------
# synthetic parameters in PyTorch layouts (deterministic)
# ----------------------------------------------------------------------------
def init_params(key, num_hiddens, kernel_size, data_len, latent_dim, regression_hidden):
    C2 = num_hiddens
    C1 = num_hiddens // 2
    K, k2, k3 = kernel_size, kernel_size // 2, kernel_size // 4
    L3 = data_len // 8
    F = C2 * L3

    keys = jax.random.split(key, 40)
    it = iter(range(40))

    def nrm(shape, s=0.1):
        return (jax.random.normal(keys[next(it)], shape) * s).astype(jnp.float32)

    def bn(c):  # (gamma, beta, running_mean, running_var)
        return (1.0 + nrm((c,)), nrm((c,)), nrm((c,)), 0.9 + jnp.abs(nrm((c,))))

    p = {}
    p["enc_w1"] = nrm((C1, 1, K))
    p["enc_w2"] = nrm((C2, C1, k2))
    p["enc_w3"] = nrm((C2, C2, k3))
    p["bn1"] = bn(C1)
    p["bn2"] = bn(C2)
    p["zm_w"], p["zm_b"] = nrm((latent_dim, F)), nrm((latent_dim,))
    p["zv_w"], p["zv_b"] = nrm((latent_dim, F)), nrm((latent_dim,))
    p["r1_w"], p["r1_b"] = nrm((regression_hidden, latent_dim)), nrm((regression_hidden,))
    p["r2_w"], p["r2_b"] = nrm((6, regression_hidden)), nrm((6,))
    p["dl_w"], p["dl_b"] = nrm((F, latent_dim)), nrm((F,))
    p["dt1_w"] = nrm((C2, C2, k3))
    p["bn3"] = bn(C2)
    p["dt2_w"] = nrm((C2, C1, k2))
    p["bn4"] = bn(C1)
    p["dt3_w"] = nrm((C1, 1, K))
    return p


# ----------------------------------------------------------------------------
if __name__ == "__main__":
    num_hiddens = 32
    kernel_size = 8
    data_len = 16
    latent_dim = 8
    regression_hidden = 16
    batch = 2

    root = jax.random.PRNGKey(0)
    k_params, k_input, k_eps = jax.random.split(root, 3)

    params = init_params(k_params, num_hiddens, kernel_size, data_len,
                         latent_dim, regression_hidden)
    x = jax.random.normal(k_input, (batch, 1, data_len), jnp.float32)  # NCL like PyTorch

    # one-time weight packing (numpy, outside the jitted forward)
    weights, dims = prepare_weights(params, num_hiddens=num_hiddens,
                                    kernel_size=kernel_size, data_len=data_len,
                                    latent_dim=latent_dim)
    fwd = make_vae_forward(weights, dims)

    encoded, z_mean, z_log_var, freq, decoded = jax.block_until_ready(fwd(x, k_eps))

    assert encoded.shape == (batch, latent_dim)
    assert z_mean.shape == (batch, latent_dim)
    assert z_log_var.shape == (batch, latent_dim)
    assert freq.shape == (batch, 6)
    assert decoded.shape == (batch, 1, data_len)
    assert all(bool(jnp.all(jnp.isfinite(o))) for o in
               (encoded, z_mean, z_log_var, freq, decoded))
    print("KERNEL_OK")
</pallas_src>

<mosaic_0001>
module attributes {stable_mosaic.version = 11 : i64} {
  func.func @_vae_kernel(%arg0: i32, %arg1: memref<8x128xf32, #tpu.memory_space<vmem>>, %arg2: memref<8x128xf32, #tpu.memory_space<vmem>>, %arg3: memref<128x128xbf16, #tpu.memory_space<vmem>>, %arg4: memref<1x128xf32, #tpu.memory_space<vmem>>, %arg5: memref<1x128xf32, #tpu.memory_space<vmem>>, %arg6: memref<128x128xbf16, #tpu.memory_space<vmem>>, %arg7: memref<128x128xbf16, #tpu.memory_space<vmem>>, %arg8: memref<1x128xf32, #tpu.memory_space<vmem>>, %arg9: memref<1x128xf32, #tpu.memory_space<vmem>>, %arg10: memref<128x256xbf16, #tpu.memory_space<vmem>>, %arg11: memref<1x256xf32, #tpu.memory_space<vmem>>, %arg12: memref<128x128xbf16, #tpu.memory_space<vmem>>, %arg13: memref<1x128xf32, #tpu.memory_space<vmem>>, %arg14: memref<128x128xbf16, #tpu.memory_space<vmem>>, %arg15: memref<1x128xf32, #tpu.memory_space<vmem>>, %arg16: memref<128x128xbf16, #tpu.memory_space<vmem>>, %arg17: memref<1x128xf32, #tpu.memory_space<vmem>>, %arg18: memref<128x128xbf16, #tpu.memory_space<vmem>>, %arg19: memref<1x128xf32, #tpu.memory_space<vmem>>, %arg20: memref<1x128xf32, #tpu.memory_space<vmem>>, %arg21: memref<128x128xbf16, #tpu.memory_space<vmem>>, %arg22: memref<1x128xf32, #tpu.memory_space<vmem>>, %arg23: memref<1x128xf32, #tpu.memory_space<vmem>>, %arg24: memref<128x128xbf16, #tpu.memory_space<vmem>>, %arg25: memref<8x640xf32, #tpu.memory_space<vmem>>) attributes {dimension_semantics = [#tpu.dimension_semantics<parallel>], iteration_bounds = array<i64: 1>, scalar_prefetch = 0 : i64, scratch_operands = 0 : i64, tpu.core_type = #tpu.core_type<tc>, window_params = [{transform_indices = @transform_0, window_bounds = array<i64: 8, 128>}, {transform_indices = @transform_1, window_bounds = array<i64: 8, 128>}, {pipeline_mode = #tpu.pipeline_mode<synchronous>, transform_indices = @transform_2, window_bounds = array<i64: 128, 128>}, {pipeline_mode = #tpu.pipeline_mode<synchronous>, transform_indices = @transform_3, window_bounds = array<i64: 1, 128>}, {pipeline_mode = #tpu.pipeline_mode<synchronous>, transform_indices = @transform_4, window_bounds = array<i64: 1, 128>}, {pipeline_mode = #tpu.pipeline_mode<synchronous>, transform_indices = @transform_5, window_bounds = array<i64: 128, 128>}, {pipeline_mode = #tpu.pipeline_mode<synchronous>, transform_indices = @transform_6, window_bounds = array<i64: 128, 128>}, {pipeline_mode = #tpu.pipeline_mode<synchronous>, transform_indices = @transform_7, window_bounds = array<i64: 1, 128>}, {pipeline_mode = #tpu.pipeline_mode<synchronous>, transform_indices = @transform_8, window_bounds = array<i64: 1, 128>}, {pipeline_mode = #tpu.pipeline_mode<synchronous>, transform_indices = @transform_9, window_bounds = array<i64: 128, 256>}, {pipeline_mode = #tpu.pipeline_mode<synchronous>, transform_indices = @transform_10, window_bounds = array<i64: 1, 256>}, {pipeline_mode = #tpu.pipeline_mode<synchronous>, transform_indices = @transform_11, window_bounds = array<i64: 128, 128>}, {pipeline_mode = #tpu.pipeline_mode<synchronous>, transform_indices = @transform_12, window_bounds = array<i64: 1, 128>}, {pipeline_mode = #tpu.pipeline_mode<synchronous>, transform_indices = @transform_13, window_bounds = array<i64: 128, 128>}, {pipeline_mode = #tpu.pipeline_mode<synchronous>, transform_indices = @transform_14, window_bounds = array<i64: 1, 128>}, {pipeline_mode = #tpu.pipeline_mode<synchronous>, transform_indices = @transform_15, window_bounds = array<i64: 128, 128>}, {pipeline_mode = #tpu.pipeline_mode<synchronous>, transform_indices = @transform_16, window_bounds = array<i64: 1, 128>}, {pipeline_mode = #tpu.pipeline_mode<synchronous>, transform_indices = @transform_17, window_bounds = array<i64: 128, 128>}, {pipeline_mode = #tpu.pipeline_mode<synchronous>, transform_indices = @transform_18, window_bounds = array<i64: 1, 128>}, {pipeline_mode = #tpu.pipeline_mode<synchronous>, transform_indices = @transform_19, window_bounds = array<i64: 1, 128>}, {pipeline_mode = #tpu.pipeline_mode<synchronous>, transform_indices = @transform_20, window_bounds = array<i64: 128, 128>}, {pipeline_mode = #tpu.pipeline_mode<synchronous>, transform_indices = @transform_21, window_bounds = array<i64: 1, 128>}, {pipeline_mode = #tpu.pipeline_mode<synchronous>, transform_indices = @transform_22, window_bounds = array<i64: 1, 128>}, {pipeline_mode = #tpu.pipeline_mode<synchronous>, transform_indices = @transform_23, window_bounds = array<i64: 128, 128>}, {transform_indices = @transform_24, window_bounds = array<i64: 8, 640>}]} {
    %c0 = arith.constant 0 : index
    %c0_0 = arith.constant 0 : index
    %0 = vector.load %arg1[%c0, %c0_0] : memref<8x128xf32, #tpu.memory_space<vmem>>, vector<8x128xf32>
    %1 = arith.truncf %0 : vector<8x128xf32> to vector<8x128xbf16>
    %c0_1 = arith.constant 0 : index
    %c0_2 = arith.constant 0 : index
    %2 = vector.load %arg3[%c0_1, %c0_2] : memref<128x128xbf16, #tpu.memory_space<vmem>>, vector<128x128xbf16>
    %cst = arith.constant dense<0.000000e+00> : vector<8x128xf32>
    %3 = tpu.matmul %1, %2, %cst {dimension_numbers = #tpu.dot_dimension_numbers<[1], [0], [0], [1], [0, 0, 1, 1], [], []>} : vector<8x128xbf16>, vector<128x128xbf16>, vector<8x128xf32> -> vector<8x128xf32>
    %cst_3 = arith.constant 0.000000e+00 : f32
    %4 = vector.broadcast %cst_3 : f32 to vector<8x128xf32>
    %5 = arith.cmpf oge, %3, %4 : vector<8x128xf32>
    %cst_4 = arith.constant 0.00999999977 : f32
    %6 = vector.broadcast %cst_4 : f32 to vector<8x128xf32>
    %7 = arith.mulf %6, %3 : vector<8x128xf32>
    %8 = arith.select %5, %3, %7 : vector<8x128xi1>, vector<8x128xf32>
    %c0_5 = arith.constant 0 : index
    %c0_6 = arith.constant 0 : index
    %9 = vector.load %arg4[%c0_5, %c0_6] : memref<1x128xf32, #tpu.memory_space<vmem>>, vector<1x128xf32>
    %10 = vector.broadcast %9 : vector<1x128xf32> to vector<8x128xf32>
    %11 = arith.mulf %8, %10 : vector<8x128xf32>
    %c0_7 = arith.constant 0 : index
    %c0_8 = arith.constant 0 : index
    %12 = vector.load %arg5[%c0_7, %c0_8] : memref<1x128xf32, #tpu.memory_space<vmem>>, vector<1x128xf32>
    %13 = vector.broadcast %12 : vector<1x128xf32> to vector<8x128xf32>
    %14 = arith.addf %11, %13 : vector<8x128xf32>
    %15 = arith.truncf %14 : vector<8x128xf32> to vector<8x128xbf16>
    %c0_9 = arith.constant 0 : index
    %c0_10 = arith.constant 0 : index
    %16 = vector.load %arg6[%c0_9, %c0_10] : memref<128x128xbf16, #tpu.memory_space<vmem>>, vector<128x128xbf16>
    %cst_11 = arith.constant dense<0.000000e+00> : vector<8x128xf32>
    %17 = tpu.matmul %15, %16, %cst_11 {dimension_numbers = #tpu.dot_dimension_numbers<[1], [0], [0], [1], [0, 0, 1, 1], [], []>} : vector<8x128xbf16>, vector<128x128xbf16>, vector<8x128xf32> -> vector<8x128xf32>
    %cst_12 = arith.constant 0.000000e+00 : f32
    %18 = vector.broadcast %cst_12 : f32 to vector<8x128xf32>
    %19 = arith.cmpf oge, %17, %18 : vector<8x128xf32>
    %cst_13 = arith.constant 0.00999999977 : f32
    %20 = vector.broadcast %cst_13 : f32 to vector<8x128xf32>
    %21 = arith.mulf %20, %17 : vector<8x128xf32>
    %22 = arith.select %19, %17, %21 : vector<8x128xi1>, vector<8x128xf32>
    %23 = arith.truncf %22 : vector<8x128xf32> to vector<8x128xbf16>
    %c0_14 = arith.constant 0 : index
    %c0_15 = arith.constant 0 : index
    %24 = vector.load %arg7[%c0_14, %c0_15] : memref<128x128xbf16, #tpu.memory_space<vmem>>, vector<128x128xbf16>
    %cst_16 = arith.constant dense<0.000000e+00> : vector<8x128xf32>
    %25 = tpu.matmul %23, %24, %cst_16 {dimension_numbers = #tpu.dot_dimension_numbers<[1], [0], [0], [1], [0, 0, 1, 1], [], []>} : vector<8x128xbf16>, vector<128x128xbf16>, vector<8x128xf32> -> vector<8x128xf32>
    %c0_17 = arith.constant 0 : index
    %c0_18 = arith.constant 0 : index
    %26 = vector.load %arg8[%c0_17, %c0_18] : memref<1x128xf32, #tpu.memory_space<vmem>>, vector<1x128xf32>
    %27 = vector.broadcast %26 : vector<1x128xf32> to vector<8x128xf32>
    %28 = arith.mulf %25, %27 : vector<8x128xf32>
    %c0_19 = arith.constant 0 : index
    %c0_20 = arith.constant 0 : index
    %29 = vector.load %arg9[%c0_19, %c0_20] : memref<1x128xf32, #tpu.memory_space<vmem>>, vector<1x128xf32>
    %30 = vector.broadcast %29 : vector<1x128xf32> to vector<8x128xf32>
    %31 = arith.addf %28, %30 : vector<8x128xf32>
    %cst_21 = arith.constant 0.000000e+00 : f32
    %32 = vector.broadcast %cst_21 : f32 to vector<8x128xf32>
    %33 = arith.cmpf oge, %31, %32 : vector<8x128xf32>
    %cst_22 = arith.constant 0.00999999977 : f32
    %34 = vector.broadcast %cst_22 : f32 to vector<8x128xf32>
    %35 = arith.mulf %34, %31 : vector<8x128xf32>
    %36 = arith.select %33, %31, %35 : vector<8x128xi1>, vector<8x128xf32>
    %37 = arith.truncf %36 : vector<8x128xf32> to vector<8x128xbf16>
    %c0_23 = arith.constant 0 : index
    %c0_24 = arith.constant 0 : index
    %38 = vector.load %arg10[%c0_23, %c0_24] : memref<128x256xbf16, #tpu.memory_space<vmem>>, vector<128x256xbf16>
    %cst_25 = arith.constant dense<0.000000e+00> : vector<8x256xf32>
    %39 = tpu.matmul %37, %38, %cst_25 {dimension_numbers = #tpu.dot_dimension_numbers<[1], [0], [0], [1], [0, 0, 1, 1], [], []>} : vector<8x128xbf16>, vector<128x256xbf16>, vector<8x256xf32> -> vector<8x256xf32>
    %c0_26 = arith.constant 0 : index
    %c0_27 = arith.constant 0 : index
    %40 = vector.load %arg11[%c0_26, %c0_27] : memref<1x256xf32, #tpu.memory_space<vmem>>, vector<1x256xf32>
    %41 = vector.broadcast %40 : vector<1x256xf32> to vector<8x256xf32>
    %42 = arith.addf %39, %41 : vector<8x256xf32>
    %43 = vector.extract_strided_slice %42 {offsets = [0, 0], sizes = [8, 128], strides = [1, 1]} : vector<8x256xf32> to vector<8x128xf32>
    %44 = vector.extract_strided_slice %42 {offsets = [0, 128], sizes = [8, 128], strides = [1, 1]} : vector<8x256xf32> to vector<8x128xf32>
    %c0_28 = arith.constant 0 : index
    %c0_29 = arith.constant 0 : index
    %45 = vector.load %arg2[%c0_28, %c0_29] : memref<8x128xf32, #tpu.memory_space<vmem>>, vector<8x128xf32>
    %cst_30 = arith.constant 5.000000e-01 : f32
    %46 = vector.broadcast %cst_30 : f32 to vector<8x128xf32>
    %47 = arith.mulf %46, %44 : vector<8x128xf32>
    %48 = math.exp %47 : vector<8x128xf32>
    %49 = arith.mulf %45, %48 : vector<8x128xf32>
    %50 = arith.addf %43, %49 : vector<8x128xf32>
    %51 = arith.truncf %50 : vector<8x128xf32> to vector<8x128xbf16>
    %c0_31 = arith.constant 0 : index
    %c0_32 = arith.constant 0 : index
    %52 = vector.load %arg12[%c0_31, %c0_32] : memref<128x128xbf16, #tpu.memory_space<vmem>>, vector<128x128xbf16>
    %cst_33 = arith.constant dense<0.000000e+00> : vector<8x128xf32>
    %53 = tpu.matmul %51, %52, %cst_33 {dimension_numbers = #tpu.dot_dimension_numbers<[1], [0], [0], [1], [0, 0, 1, 1], [], []>} : vector<8x128xbf16>, vector<128x128xbf16>, vector<8x128xf32> -> vector<8x128xf32>
    %c0_34 = arith.constant 0 : index
    %c0_35 = arith.constant 0 : index
    %54 = vector.load %arg13[%c0_34, %c0_35] : memref<1x128xf32, #tpu.memory_space<vmem>>, vector<1x128xf32>
    %55 = vector.broadcast %54 : vector<1x128xf32> to vector<8x128xf32>
    %56 = arith.addf %53, %55 : vector<8x128xf32>
    %57 = arith.truncf %56 : vector<8x128xf32> to vector<8x128xbf16>
    %c0_36 = arith.constant 0 : index
    %c0_37 = arith.constant 0 : index
    %58 = vector.load %arg14[%c0_36, %c0_37] : memref<128x128xbf16, #tpu.memory_space<vmem>>, vector<128x128xbf16>
    %cst_38 = arith.constant dense<0.000000e+00> : vector<8x128xf32>
    %59 = tpu.matmul %57, %58, %cst_38 {dimension_numbers = #tpu.dot_dimension_numbers<[1], [0], [0], [1], [0, 0, 1, 1], [], []>} : vector<8x128xbf16>, vector<128x128xbf16>, vector<8x128xf32> -> vector<8x128xf32>
    %c0_39 = arith.constant 0 : index
    %c0_40 = arith.constant 0 : index
    %60 = vector.load %arg15[%c0_39, %c0_40] : memref<1x128xf32, #tpu.memory_space<vmem>>, vector<1x128xf32>
    %61 = vector.broadcast %60 : vector<1x128xf32> to vector<8x128xf32>
    %62 = arith.addf %59, %61 : vector<8x128xf32>
    %cst_41 = arith.constant 0.000000e+00 : f32
    %63 = vector.broadcast %cst_41 : f32 to vector<8x128xf32>
    %64 = arith.subf %63, %62 : vector<8x128xf32>
    %65 = math.exp %64 : vector<8x128xf32>
    %cst_42 = arith.constant 1.000000e+00 : f32
    %66 = vector.broadcast %cst_42 : f32 to vector<8x128xf32>
    %67 = arith.addf %66, %65 : vector<8x128xf32>
    %68 = tpu.reciprocal %67 {approx = true} : vector<8x128xf32> -> vector<8x128xf32>
    %69 = arith.truncf %50 : vector<8x128xf32> to vector<8x128xbf16>
    %c0_43 = arith.constant 0 : index
    %c0_44 = arith.constant 0 : index
    %70 = vector.load %arg16[%c0_43, %c0_44] : memref<128x128xbf16, #tpu.memory_space<vmem>>, vector<128x128xbf16>
    %cst_45 = arith.constant dense<0.000000e+00> : vector<8x128xf32>
    %71 = tpu.matmul %69, %70, %cst_45 {dimension_numbers = #tpu.dot_dimension_numbers<[1], [0], [0], [1], [0, 0, 1, 1], [], []>} : vector<8x128xbf16>, vector<128x128xbf16>, vector<8x128xf32> -> vector<8x128xf32>
    %c0_46 = arith.constant 0 : index
    %c0_47 = arith.constant 0 : index
    %72 = vector.load %arg17[%c0_46, %c0_47] : memref<1x128xf32, #tpu.memory_space<vmem>>, vector<1x128xf32>
    %73 = vector.broadcast %72 : vector<1x128xf32> to vector<8x128xf32>
    %74 = arith.addf %71, %73 : vector<8x128xf32>
    %75 = arith.truncf %74 : vector<8x128xf32> to vector<8x128xbf16>
    %c0_48 = arith.constant 0 : index
    %c0_49 = arith.constant 0 : index
    %76 = vector.load %arg18[%c0_48, %c0_49] : memref<128x128xbf16, #tpu.memory_space<vmem>>, vector<128x128xbf16>
    %cst_50 = arith.constant dense<0.000000e+00> : vector<8x128xf32>
    %77 = tpu.matmul %75, %76, %cst_50 {dimension_numbers = #tpu.dot_dimension_numbers<[1], [0], [0], [1], [0, 0, 1, 1], [], []>} : vector<8x128xbf16>, vector<128x128xbf16>, vector<8x128xf32> -> vector<8x128xf32>
    %c0_51 = arith.constant 0 : index
    %c0_52 = arith.constant 0 : index
    %78 = vector.load %arg19[%c0_51, %c0_52] : memref<1x128xf32, #tpu.memory_space<vmem>>, vector<1x128xf32>
    %79 = vector.broadcast %78 : vector<1x128xf32> to vector<8x128xf32>
    %80 = arith.mulf %77, %79 : vector<8x128xf32>
    %c0_53 = arith.constant 0 : index
    %c0_54 = arith.constant 0 : index
    %81 = vector.load %arg20[%c0_53, %c0_54] : memref<1x128xf32, #tpu.memory_space<vmem>>, vector<1x128xf32>
    %82 = vector.broadcast %81 : vector<1x128xf32> to vector<8x128xf32>
    %83 = arith.addf %80, %82 : vector<8x128xf32>
    %cst_55 = arith.constant 0.000000e+00 : f32
    %84 = vector.broadcast %cst_55 : f32 to vector<8x128xf32>
    %85 = arith.cmpf oge, %83, %84 : vector<8x128xf32>
    %cst_56 = arith.constant 0.00999999977 : f32
    %86 = vector.broadcast %cst_56 : f32 to vector<8x128xf32>
    %87 = arith.mulf %86, %83 : vector<8x128xf32>
    %88 = arith.select %85, %83, %87 : vector<8x128xi1>, vector<8x128xf32>
    %89 = arith.truncf %88 : vector<8x128xf32> to vector<8x128xbf16>
    %c0_57 = arith.constant 0 : index
    %c0_58 = arith.constant 0 : index
    %90 = vector.load %arg21[%c0_57, %c0_58] : memref<128x128xbf16, #tpu.memory_space<vmem>>, vector<128x128xbf16>
    %cst_59 = arith.constant dense<0.000000e+00> : vector<8x128xf32>
    %91 = tpu.matmul %89, %90, %cst_59 {dimension_numbers = #tpu.dot_dimension_numbers<[1], [0], [0], [1], [0, 0, 1, 1], [], []>} : vector<8x128xbf16>, vector<128x128xbf16>, vector<8x128xf32> -> vector<8x128xf32>
    %c0_60 = arith.constant 0 : index
    %c0_61 = arith.constant 0 : index
    %92 = vector.load %arg22[%c0_60, %c0_61] : memref<1x128xf32, #tpu.memory_space<vmem>>, vector<1x128xf32>
    %93 = vector.broadcast %92 : vector<1x128xf32> to vector<8x128xf32>
    %94 = arith.mulf %91, %93 : vector<8x128xf32>
    %c0_62 = arith.constant 0 : index
    %c0_63 = arith.constant 0 : index
    %95 = vector.load %arg23[%c0_62, %c0_63] : memref<1x128xf32, #tpu.memory_space<vmem>>, vector<1x128xf32>
    %96 = vector.broadcast %95 : vector<1x128xf32> to vector<8x128xf32>
    %97 = arith.addf %94, %96 : vector<8x128xf32>
    %cst_64 = arith.constant 0.000000e+00 : f32
    %98 = vector.broadcast %cst_64 : f32 to vector<8x128xf32>
    %99 = arith.cmpf oge, %97, %98 : vector<8x128xf32>
    %cst_65 = arith.constant 0.00999999977 : f32
    %100 = vector.broadcast %cst_65 : f32 to vector<8x128xf32>
    %101 = arith.mulf %100, %97 : vector<8x128xf32>
    %102 = arith.select %99, %97, %101 : vector<8x128xi1>, vector<8x128xf32>
    %103 = arith.truncf %102 : vector<8x128xf32> to vector<8x128xbf16>
    %c0_66 = arith.constant 0 : index
    %c0_67 = arith.constant 0 : index
    %104 = vector.load %arg24[%c0_66, %c0_67] : memref<128x128xbf16, #tpu.memory_space<vmem>>, vector<128x128xbf16>
    %cst_68 = arith.constant dense<0.000000e+00> : vector<8x128xf32>
    %105 = tpu.matmul %103, %104, %cst_68 {dimension_numbers = #tpu.dot_dimension_numbers<[1], [0], [0], [1], [0, 0, 1, 1], [], []>} : vector<8x128xbf16>, vector<128x128xbf16>, vector<8x128xf32> -> vector<8x128xf32>
    %cst_69 = arith.constant 0.000000e+00 : f32
    %106 = vector.broadcast %cst_69 : f32 to vector<8x128xf32>
    %107 = arith.cmpf oge, %105, %106 : vector<8x128xf32>
    %cst_70 = arith.constant 0.00999999977 : f32
    %108 = vector.broadcast %cst_70 : f32 to vector<8x128xf32>
    %109 = arith.mulf %108, %105 : vector<8x128xf32>
    %110 = arith.select %107, %105, %109 : vector<8x128xi1>, vector<8x128xf32>
    %cst_71 = arith.constant 0.000000e+00 : f32
    %111 = vector.broadcast %cst_71 : f32 to vector<8x128xf32>
    %112 = arith.subf %111, %110 : vector<8x128xf32>
    %113 = math.exp %112 : vector<8x128xf32>
    %cst_72 = arith.constant 1.000000e+00 : f32
    %114 = vector.broadcast %cst_72 : f32 to vector<8x128xf32>
    %115 = arith.addf %114, %113 : vector<8x128xf32>
    %116 = tpu.reciprocal %115 {approx = true} : vector<8x128xf32> -> vector<8x128xf32>
    %c0_73 = arith.constant 0 : index
    %c0_74 = arith.constant 0 : index
    %117 = vector.load %arg25[%c0_73, %c0_74] : memref<8x640xf32, #tpu.memory_space<vmem>>, vector<8x128xf32>
    tpu.vector_store %arg25[%c0_73, %c0_74], %43 {strides = array<i32>} : memref<8x640xf32, #tpu.memory_space<vmem>>, vector<8x128xf32>,
    %c0_75 = arith.constant 0 : index
    %c128 = arith.constant 128 : index
    %118 = vector.load %arg25[%c0_75, %c128] : memref<8x640xf32, #tpu.memory_space<vmem>>, vector<8x128xf32>
    tpu.vector_store %arg25[%c0_75, %c128], %44 {strides = array<i32>} : memref<8x640xf32, #tpu.memory_space<vmem>>, vector<8x128xf32>,
    %c0_76 = arith.constant 0 : index
    %c256 = arith.constant 256 : index
    %119 = vector.load %arg25[%c0_76, %c256] : memref<8x640xf32, #tpu.memory_space<vmem>>, vector<8x128xf32>
    tpu.vector_store %arg25[%c0_76, %c256], %50 {strides = array<i32>} : memref<8x640xf32, #tpu.memory_space<vmem>>, vector<8x128xf32>,
    %c0_77 = arith.constant 0 : index
    %c384 = arith.constant 384 : index
    %120 = vector.load %arg25[%c0_77, %c384] : memref<8x640xf32, #tpu.memory_space<vmem>>, vector<8x128xf32>
    tpu.vector_store %arg25[%c0_77, %c384], %68 {strides = array<i32>} : memref<8x640xf32, #tpu.memory_space<vmem>>, vector<8x128xf32>,
    %c0_78 = arith.constant 0 : index
    %c512 = arith.constant 512 : index
    %121 = vector.load %arg25[%c0_78, %c512] : memref<8x640xf32, #tpu.memory_space<vmem>>, vector<8x128xf32>
    tpu.vector_store %arg25[%c0_78, %c512], %116 {strides = array<i32>} : memref<8x640xf32, #tpu.memory_space<vmem>>, vector<8x128xf32>,
    return
  }
  func.func @transform_0(%arg0: i32) -> (i32, i32) {
    %c0_i32 = arith.constant 0 : i32
    %c0_i32_0 = arith.constant 0 : i32
    return %arg0, %c0_i32 : i32, i32
  }
  func.func @transform_1(%arg0: i32) -> (i32, i32) {
    %c0_i32 = arith.constant 0 : i32
    %c0_i32_0 = arith.constant 0 : i32
    return %arg0, %c0_i32 : i32, i32
  }
  func.func @transform_2(%arg0: i32) -> (i32, i32) {
    %c0_i32 = arith.constant 0 : i32
    %c0_i32_0 = arith.constant 0 : i32
    %c0_i32_1 = arith.constant 0 : i32
    return %c0_i32, %c0_i32_0 : i32, i32
  }
  func.func @transform_3(%arg0: i32) -> (i32, i32) {
    %c0_i32 = arith.constant 0 : i32
    %c0_i32_0 = arith.constant 0 : i32
    %c0_i32_1 = arith.constant 0 : i32
    return %c0_i32, %c0_i32_0 : i32, i32
  }
  func.func @transform_4(%arg0: i32) -> (i32, i32) {
    %c0_i32 = arith.constant 0 : i32
    %c0_i32_0 = arith.constant 0 : i32
    %c0_i32_1 = arith.constant 0 : i32
    return %c0_i32, %c0_i32_0 : i32, i32
  }
  func.func @transform_5(%arg0: i32) -> (i32, i32) {
    %c0_i32 = arith.constant 0 : i32
    %c0_i32_0 = arith.constant 0 : i32
    %c0_i32_1 = arith.constant 0 : i32
    return %c0_i32, %c0_i32_0 : i32, i32
  }
  func.func @transform_6(%arg0: i32) -> (i32, i32) {
    %c0_i32 = arith.constant 0 : i32
    %c0_i32_0 = arith.constant 0 : i32
    %c0_i32_1 = arith.constant 0 : i32
    return %c0_i32, %c0_i32_0 : i32, i32
  }
  func.func @transform_7(%arg0: i32) -> (i32, i32) {
    %c0_i32 = arith.constant 0 : i32
    %c0_i32_0 = arith.constant 0 : i32
    %c0_i32_1 = arith.constant 0 : i32
    return %c0_i32, %c0_i32_0 : i32, i32
  }
  func.func @transform_8(%arg0: i32) -> (i32, i32) {
    %c0_i32 = arith.constant 0 : i32
    %c0_i32_0 = arith.constant 0 : i32
    %c0_i32_1 = arith.constant 0 : i32
    return %c0_i32, %c0_i32_0 : i32, i32
  }
  func.func @transform_9(%arg0: i32) -> (i32, i32) {
    %c0_i32 = arith.constant 0 : i32
    %c0_i32_0 = arith.constant 0 : i32
    %c0_i32_1 = arith.constant 0 : i32
    return %c0_i32, %c0_i32_0 : i32, i32
  }
  func.func @transform_10(%arg0: i32) -> (i32, i32) {
    %c0_i32 = arith.constant 0 : i32
    %c0_i32_0 = arith.constant 0 : i32
    %c0_i32_1 = arith.constant 0 : i32
    return %c0_i32, %c0_i32_0 : i32, i32
  }
  func.func @transform_11(%arg0: i32) -> (i32, i32) {
    %c0_i32 = arith.constant 0 : i32
    %c0_i32_0 = arith.constant 0 : i32
    %c0_i32_1 = arith.constant 0 : i32
    return %c0_i32, %c0_i32_0 : i32, i32
  }
  func.func @transform_12(%arg0: i32) -> (i32, i32) {
    %c0_i32 = arith.constant 0 : i32
    %c0_i32_0 = arith.constant 0 : i32
    %c0_i32_1 = arith.constant 0 : i32
    return %c0_i32, %c0_i32_0 : i32, i32
  }
  func.func @transform_13(%arg0: i32) -> (i32, i32) {
    %c0_i32 = arith.constant 0 : i32
    %c0_i32_0 = arith.constant 0 : i32
    %c0_i32_1 = arith.constant 0 : i32
    return %c0_i32, %c0_i32_0 : i32, i32
  }
  func.func @transform_14(%arg0: i32) -> (i32, i32) {
    %c0_i32 = arith.constant 0 : i32
    %c0_i32_0 = arith.constant 0 : i32
    %c0_i32_1 = arith.constant 0 : i32
    return %c0_i32, %c0_i32_0 : i32, i32
  }
  func.func @transform_15(%arg0: i32) -> (i32, i32) {
    %c0_i32 = arith.constant 0 : i32
    %c0_i32_0 = arith.constant 0 : i32
    %c0_i32_1 = arith.constant 0 : i32
    return %c0_i32, %c0_i32_0 : i32, i32
  }
  func.func @transform_16(%arg0: i32) -> (i32, i32) {
    %c0_i32 = arith.constant 0 : i32
    %c0_i32_0 = arith.constant 0 : i32
    %c0_i32_1 = arith.constant 0 : i32
    return %c0_i32, %c0_i32_0 : i32, i32
  }
  func.func @transform_17(%arg0: i32) -> (i32, i32) {
    %c0_i32 = arith.constant 0 : i32
    %c0_i32_0 = arith.constant 0 : i32
    %c0_i32_1 = arith.constant 0 : i32
    return %c0_i32, %c0_i32_0 : i32, i32
  }
  func.func @transform_18(%arg0: i32) -> (i32, i32) {
    %c0_i32 = arith.constant 0 : i32
    %c0_i32_0 = arith.constant 0 : i32
    %c0_i32_1 = arith.constant 0 : i32
    return %c0_i32, %c0_i32_0 : i32, i32
  }
  func.func @transform_19(%arg0: i32) -> (i32, i32) {
    %c0_i32 = arith.constant 0 : i32
    %c0_i32_0 = arith.constant 0 : i32
    %c0_i32_1 = arith.constant 0 : i32
    return %c0_i32, %c0_i32_0 : i32, i32
  }
  func.func @transform_20(%arg0: i32) -> (i32, i32) {
    %c0_i32 = arith.constant 0 : i32
    %c0_i32_0 = arith.constant 0 : i32
    %c0_i32_1 = arith.constant 0 : i32
    return %c0_i32, %c0_i32_0 : i32, i32
  }
  func.func @transform_21(%arg0: i32) -> (i32, i32) {
    %c0_i32 = arith.constant 0 : i32
    %c0_i32_0 = arith.constant 0 : i32
    %c0_i32_1 = arith.constant 0 : i32
    return %c0_i32, %c0_i32_0 : i32, i32
  }
  func.func @transform_22(%arg0: i32) -> (i32, i32) {
    %c0_i32 = arith.constant 0 : i32
    %c0_i32_0 = arith.constant 0 : i32
    %c0_i32_1 = arith.constant 0 : i32
    return %c0_i32, %c0_i32_0 : i32, i32
  }
  func.func @transform_23(%arg0: i32) -> (i32, i32) {
    %c0_i32 = arith.constant 0 : i32
    %c0_i32_0 = arith.constant 0 : i32
    %c0_i32_1 = arith.constant 0 : i32
    return %c0_i32, %c0_i32_0 : i32, i32
  }
  func.func @transform_24(%arg0: i32) -> (i32, i32) {
    %c0_i32 = arith.constant 0 : i32
    %c0_i32_0 = arith.constant 0 : i32
    return %arg0, %c0_i32 : i32, i32
  }
}

</mosaic_0001>

<llo_original>
// kernel: forward.1
$region0: #{forward.1}
  #allocation0 [shape = 'u32[]', space=smem, size = 0x4, offset = 0x4, fixed_abs, tag = 'smem constant byte address 0x4 - core index']
  #allocation1 [shape = 'u32[72,128]{1,0:T(1,128)}', space=vmem, size = 0x9000, scoped, tag = 'internal scratch']
  %s0 = inlined_call_operand.vmem [shape: f32[8,128], index: 0, kind: input, shape index: {}]
  %s1 = inlined_call_operand.vmem [shape: f32[8,128], index: 1, kind: input, shape index: {}]
  %s2 = inlined_call_operand.hbm [shape: bf16[128,128], index: 2, kind: input, shape index: {}]
  %s3 = inlined_call_operand.vmem [shape: f32[1,128], index: 3, kind: input, shape index: {}]
  %s4 = inlined_call_operand.vmem [shape: f32[1,128], index: 4, kind: input, shape index: {}]
  %s5 = inlined_call_operand.hbm [shape: bf16[128,128], index: 5, kind: input, shape index: {}]
  %s6 = inlined_call_operand.hbm [shape: bf16[128,128], index: 6, kind: input, shape index: {}]
  %s7 = inlined_call_operand.vmem [shape: f32[1,128], index: 7, kind: input, shape index: {}]
  %s8 = inlined_call_operand.vmem [shape: f32[1,128], index: 8, kind: input, shape index: {}]
  %s9 = inlined_call_operand.hbm [shape: bf16[128,256], index: 9, kind: input, shape index: {}]
  %s10 = inlined_call_operand.vmem [shape: f32[1,256], index: 10, kind: input, shape index: {}]
  %s11 = inlined_call_operand.hbm [shape: bf16[128,128], index: 11, kind: input, shape index: {}]
  %s12 = inlined_call_operand.vmem [shape: f32[1,128], index: 12, kind: input, shape index: {}]
  %s13 = inlined_call_operand.hbm [shape: bf16[128,128], index: 13, kind: input, shape index: {}]
  %s14 = inlined_call_operand.vmem [shape: f32[1,128], index: 14, kind: input, shape index: {}]
  %s15 = inlined_call_operand.hbm [shape: bf16[128,128], index: 15, kind: input, shape index: {}]
  %s16 = inlined_call_operand.vmem [shape: f32[1,128], index: 16, kind: input, shape index: {}]
  %s17 = inlined_call_operand.hbm [shape: bf16[128,128], index: 17, kind: input, shape index: {}]
  %s18 = inlined_call_operand.vmem [shape: f32[1,128], index: 18, kind: input, shape index: {}]
  %s19 = inlined_call_operand.vmem [shape: f32[1,128], index: 19, kind: input, shape index: {}]
  %s20 = inlined_call_operand.hbm [shape: bf16[128,128], index: 20, kind: input, shape index: {}]
  %s21 = inlined_call_operand.vmem [shape: f32[1,128], index: 21, kind: input, shape index: {}]
  %s22 = inlined_call_operand.vmem [shape: f32[1,128], index: 22, kind: input, shape index: {}]
  %s23 = inlined_call_operand.hbm [shape: bf16[128,128], index: 23, kind: input, shape index: {}]
  %s24 = inlined_call_operand.vmem [shape: f32[8,640], index: 24, kind: output, shape index: {}]
  %s25 = sld [smem:[#allocation0]]
  $region146: #{forward.1} parent=0
    _
  %s27 = ssub.s32 1, %s25
  %s28 = scalar_select 0, %s27, %s25
  $region1: #{forward.1} parent=0
    #allocation2 [shape = 'u8[32768]{0}', space=vmem, size = 0x8000, scoped, tag = 'input window, operand 2, single buffered']
    #allocation3 [shape = 's32[1]{0}', space=sflag, size = 0x4, scoped, tag = 'scoped memory for forward.1']
    #allocation4 [shape = 'u8[32768]{0}', space=vmem, size = 0x8000, scoped, tag = 'input window, operand 5, single buffered']
    #allocation5 [shape = 's32[1]{0}', space=sflag, size = 0x4, scoped, tag = 'scoped memory for forward.1']
    #allocation6 [shape = 'u8[32768]{0}', space=vmem, size = 0x8000, scoped, tag = 'input window, operand 6, single buffered']
    #allocation7 [shape = 'u8[65536]{0}', space=vmem, size = 0x10000, scoped, tag = 'input window, operand 9, single buffered']
    #allocation8 [shape = 's32[1]{0}', space=sflag, size = 0x4, scoped, tag = 'scoped memory for forward.1']
    #allocation9 [shape = 'u8[32768]{0}', space=vmem, size = 0x8000, scoped, tag = 'input window, operand 11, single buffered']
    #allocation10 [shape = 'u8[32768]{0}', space=vmem, size = 0x8000, scoped, tag = 'input window, operand 13, single buffered']
    #allocation11 [shape = 's32[1]{0}', space=sflag, size = 0x4, scoped, tag = 'scoped memory for forward.1']
    #allocation12 [shape = 'u8[32768]{0}', space=vmem, size = 0x8000, scoped, tag = 'input window, operand 15, single buffered']
    #allocation13 [shape = 'u8[32768]{0}', space=vmem, size = 0x8000, scoped, tag = 'input window, operand 17, single buffered']
    #allocation14 [shape = 's32[1]{0}', space=sflag, size = 0x4, scoped, tag = 'scoped memory for forward.1']
    #allocation15 [shape = 'u8[32768]{0}', space=vmem, size = 0x8000, scoped, tag = 'input window, operand 20, single buffered']
    #allocation16 [shape = 'u8[32768]{0}', space=vmem, size = 0x8000, scoped, tag = 'input window, operand 23, single buffered']
    #allocation17 [shape = 's32[1]{0}', space=sflag, size = 0x4, scoped, tag = 'scoped memory for forward.1']
    %29 = vsyncpa [#allocation3], 0
    %30 = vsyncpa [#allocation5], 0
    %31 = vsyncpa [#allocation8], 0
    %32 = vsyncpa [#allocation11], 0
    %33 = vsyncpa [#allocation14], 0
    %34 = vsyncpa [#allocation17], 0
    // Predicated region
    $region2: #{forward.1} parent=1 // pred_check
      _
    $region3: #{forward.1} parent=1 // pred_check_branch
      %36 = sbr.rel (0) target = $region5
    $region4: #{forward.1} parent=1 // pred_region
      _
    $region5: #{forward.1} parent=1 // pred_fallthru
      _
    // Predicated region
    $region6: #{forward.1} parent=1 // pred_check
      _
    $region7: #{forward.1} parent=1 // pred_check_branch
      %38 = sbr.rel (0) target = $region9
    $region8: #{forward.1} parent=1 // pred_region
      _
    $region9: #{forward.1} parent=1 // pred_fallthru
      _
    // Predicated region
    $region10: #{forward.1} parent=1 // pred_check
      _
    $region11: #{forward.1} parent=1 // pred_check_branch
      %40 = sbr.rel (0) target = $region13
    $region12: #{forward.1} parent=1 // pred_region
      %42 = vsyncadd [#allocation3], 0
      %s43 = sshll.u32 %s2, 4
      %s44 = int_to_ptr.hbm [resolvable:$true] %s43
      %s45 = sshll.u32 [#allocation2], 4
      %s46 = int_to_ptr.vmem [resolvable:$true] %s45
      %51 = dma.hbm_to_vmem [thread:$0]  %s44, 1024, %s46, [#allocation3], 64, 64, 4
    $region13: #{forward.1} parent=1 // pred_fallthru
      _
    // Predicated region
    $region14: #{forward.1} parent=1 // pred_check
      _
    $region15: #{forward.1} parent=1 // pred_check_branch
      %53 = sbr.rel (0) target = $region17
    $region16: #{forward.1} parent=1 // pred_region
      _
    $region17: #{forward.1} parent=1 // pred_fallthru
      _
    // Predicated region
    $region18: #{forward.1} parent=1 // pred_check
      _
    $region19: #{forward.1} parent=1 // pred_check_branch
      %55 = sbr.rel (0) target = $region21
    $region20: #{forward.1} parent=1 // pred_region
      _
    $region21: #{forward.1} parent=1 // pred_fallthru
      _
    // Predicated region
    $region22: #{forward.1} parent=1 // pred_check
      _
    $region23: #{forward.1} parent=1 // pred_check_branch
      %57 = sbr.rel (0) target = $region25
    $region24: #{forward.1} parent=1 // pred_region
      %59 = vsyncadd [#allocation5], 0
      %s60 = sshll.u32 %s5, 4
      %s61 = int_to_ptr.hbm [resolvable:$true] %s60
      %s62 = sshll.u32 [#allocation4], 4
      %s63 = int_to_ptr.vmem [resolvable:$true] %s62
      %68 = dma.hbm_to_vmem [thread:$0]  %s61, 1024, %s63, [#allocation5], 64, 64, 4
    $region25: #{forward.1} parent=1 // pred_fallthru
      _
    // Predicated region
    $region26: #{forward.1} parent=1 // pred_check
      _
    $region27: #{forward.1} parent=1 // pred_check_branch
      %70 = sbr.rel (0) target = $region29
    $region28: #{forward.1} parent=1 // pred_region
      %72 = vsyncadd [#allocation5], 0
      %s73 = sshll.u32 %s6, 4
      %s74 = int_to_ptr.hbm [resolvable:$true] %s73
      %s75 = sshll.u32 [#allocation6], 4
      %s76 = int_to_ptr.vmem [resolvable:$true] %s75
      %81 = dma.hbm_to_vmem [thread:$0]  %s74, 1024, %s76, [#allocation5], 64, 64, 4
    $region29: #{forward.1} parent=1 // pred_fallthru
      _
    // Predicated region
    $region30: #{forward.1} parent=1 // pred_check
      _
    $region31: #{forward.1} parent=1 // pred_check_branch
      %83 = sbr.rel (0) target = $region33
    $region32: #{forward.1} parent=1 // pred_region
      _
    $region33: #{forward.1} parent=1 // pred_fallthru
      _
    // Predicated region
    $region34: #{forward.1} parent=1 // pred_check
      _
    $region35: #{forward.1} parent=1 // pred_check_branch
      %85 = sbr.rel (0) target = $region37
    $region36: #{forward.1} parent=1 // pred_region
      _
    $region37: #{forward.1} parent=1 // pred_fallthru
      _
    // Predicated region
    $region38: #{forward.1} parent=1 // pred_check
      _
    $region39: #{forward.1} parent=1 // pred_check_branch
      %87 = sbr.rel (0) target = $region41
    $region40: #{forward.1} parent=1 // pred_region
      %89 = vsyncadd [#allocation8], 0
      %s90 = sshll.u32 %s9, 4
      %s91 = int_to_ptr.hbm [resolvable:$true] %s90
      %s92 = sshll.u32 [#allocation7], 4
      %s93 = int_to_ptr.vmem [resolvable:$true] %s92
      %98 = dma.hbm_to_vmem [thread:$0]  %s91, 2048, %s93, [#allocation8], 128, 128, 8
    $region41: #{forward.1} parent=1 // pred_fallthru
      _
    // Predicated region
    $region42: #{forward.1} parent=1 // pred_check
      _
    $region43: #{forward.1} parent=1 // pred_check_branch
      %100 = sbr.rel (0) target = $region45
    $region44: #{forward.1} parent=1 // pred_region
      _
    $region45: #{forward.1} parent=1 // pred_fallthru
      _
    // Predicated region
    $region46: #{forward.1} parent=1 // pred_check
      _
    $region47: #{forward.1} parent=1 // pred_check_branch
      %102 = sbr.rel (0) target = $region49
    $region48: #{forward.1} parent=1 // pred_region
      %104 = vsyncadd [#allocation8], 0
      %s105 = sshll.u32 %s11, 4
      %s106 = int_to_ptr.hbm [resolvable:$true] %s105
      %s107 = sshll.u32 [#allocation9], 4
      %s108 = int_to_ptr.vmem [resolvable:$true] %s107
      %113 = dma.hbm_to_vmem [thread:$0]  %s106, 1024, %s108, [#allocation8], 64, 64, 4
    $region49: #{forward.1} parent=1 // pred_fallthru
      _
    // Predicated region
    $region50: #{forward.1} parent=1 // pred_check
      _
    $region51: #{forward.1} parent=1 // pred_check_branch
      %115 = sbr.rel (0) target = $region53
    $region52: #{forward.1} parent=1 // pred_region
      _
    $region53: #{forward.1} parent=1 // pred_fallthru
      _
    // Predicated region
    $region54: #{forward.1} parent=1 // pred_check
      _
    $region55: #{forward.1} parent=1 // pred_check_branch
      %117 = sbr.rel (0) target = $region57
    $region56: #{forward.1} parent=1 // pred_region
      %119 = vsyncadd [#allocation11], 0
      %s120 = sshll.u32 %s13, 4
      %s121 = int_to_ptr.hbm [resolvable:$true] %s120
      %s122 = sshll.u32 [#allocation10], 4
      %s123 = int_to_ptr.vmem [resolvable:$true] %s122
      %128 = dma.hbm_to_vmem [thread:$0]  %s121, 1024, %s123, [#allocation11], 64, 64, 4
    $region57: #{forward.1} parent=1 // pred_fallthru
      _
    // Predicated region
    $region58: #{forward.1} parent=1 // pred_check
      _
    $region59: #{forward.1} parent=1 // pred_check_branch
      %130 = sbr.rel (0) target = $region61
    $region60: #{forward.1} parent=1 // pred_region
      _
    $region61: #{forward.1} parent=1 // pred_fallthru
      _
    // Predicated region
    $region62: #{forward.1} parent=1 // pred_check
      _
    $region63: #{forward.1} parent=1 // pred_check_branch
      %132 = sbr.rel (0) target = $region65
    $region64: #{forward.1} parent=1 // pred_region
      %134 = vsyncadd [#allocation11], 0
      %s135 = sshll.u32 %s15, 4
      %s136 = int_to_ptr.hbm [resolvable:$true] %s135
      %s137 = sshll.u32 [#allocation12], 4
      %s138 = int_to_ptr.vmem [resolvable:$true] %s137
      %143 = dma.hbm_to_vmem [thread:$0]  %s136, 1024, %s138, [#allocation11], 64, 64, 4
    $region65: #{forward.1} parent=1 // pred_fallthru
      _
    // Predicated region
    $region66: #{forward.1} parent=1 // pred_check
      _
    $region67: #{forward.1} parent=1 // pred_check_branch
      %145 = sbr.rel (0) target = $region69
    $region68: #{forward.1} parent=1 // pred_region
      _
    $region69: #{forward.1} parent=1 // pred_fallthru
      _
    // Predicated region
    $region70: #{forward.1} parent=1 // pred_check
      _
    $region71: #{forward.1} parent=1 // pred_check_branch
      %147 = sbr.rel (0) target = $region73
    $region72: #{forward.1} parent=1 // pred_region
      %149 = vsyncadd [#allocation14], 0
      %s150 = sshll.u32 %s17, 4
      %s151 = int_to_ptr.hbm [resolvable:$true] %s150
      %s152 = sshll.u32 [#allocation13], 4
      %s153 = int_to_ptr.vmem [resolvable:$true] %s152
      %158 = dma.hbm_to_vmem [thread:$0]  %s151, 1024, %s153, [#allocation14], 64, 64, 4
    $region73: #{forward.1} parent=1 // pred_fallthru
      _
    // Predicated region
    $region74: #{forward.1} parent=1 // pred_check
      _
    $region75: #{forward.1} parent=1 // pred_check_branch
      %160 = sbr.rel (0) target = $region77
    $region76: #{forward.1} parent=1 // pred_region
      _
    $region77: #{forward.1} parent=1 // pred_fallthru
      _
    // Predicated region
    $region78: #{forward.1} parent=1 // pred_check
      _
    $region79: #{forward.1} parent=1 // pred_check_branch
      %162 = sbr.rel (0) target = $region81
    $region80: #{forward.1} parent=1 // pred_region
      _
    $region81: #{forward.1} parent=1 // pred_fallthru
      _
    // Predicated region
    $region82: #{forward.1} parent=1 // pred_check
      _
    $region83: #{forward.1} parent=1 // pred_check_branch
      %164 = sbr.rel (0) target = $region85
    $region84: #{forward.1} parent=1 // pred_region
      %166 = vsyncadd [#allocation14], 0
      %s167 = sshll.u32 %s20, 4
      %s168 = int_to_ptr.hbm [resolvable:$true] %s167
      %s169 = sshll.u32 [#allocation15], 4
      %s170 = int_to_ptr.vmem [resolvable:$true] %s169
      %175 = dma.hbm_to_vmem [thread:$0]  %s168, 1024, %s170, [#allocation14], 64, 64, 4
    $region85: #{forward.1} parent=1 // pred_fallthru
      _
    // Predicated region
    $region86: #{forward.1} parent=1 // pred_check
      _
    $region87: #{forward.1} parent=1 // pred_check_branch
      %177 = sbr.rel (0) target = $region89
    $region88: #{forward.1} parent=1 // pred_region
      _
    $region89: #{forward.1} parent=1 // pred_fallthru
      _
    // Predicated region
    $region90: #{forward.1} parent=1 // pred_check
      _
    $region91: #{forward.1} parent=1 // pred_check_branch
      %179 = sbr.rel (0) target = $region93
    $region92: #{forward.1} parent=1 // pred_region
      _
    $region93: #{forward.1} parent=1 // pred_fallthru
      _
    // Predicated region
    $region94: #{forward.1} parent=1 // pred_check
      _
    $region95: #{forward.1} parent=1 // pred_check_branch
      %181 = sbr.rel (0) target = $region97
    $region96: #{forward.1} parent=1 // pred_region
      %183 = vsyncadd [#allocation17], 0
      %s184 = sshll.u32 %s23, 4
      %s185 = int_to_ptr.hbm [resolvable:$true] %s184
      %s186 = sshll.u32 [#allocation16], 4
      %s187 = int_to_ptr.vmem [resolvable:$true] %s186
      %192 = dma.hbm_to_vmem [thread:$0]  %s185, 1024, %s187, [#allocation17], 64, 64, 4
    $region97: #{forward.1} parent=1 // pred_fallthru
      _
    // Predicated region
    $region98: #{forward.1} parent=1 // pred_check
      _
    $region99: #{forward.1} parent=1 // pred_check_branch
      %194 = sbr.rel (0) target = $region101
    $region100: #{forward.1} parent=1 // pred_region
      %196 = dma.done [#allocation3], 1024
    $region101: #{forward.1} parent=1 // pred_fallthru
      _
    // Predicated region
    $region102: #{forward.1} parent=1 // pred_check
      _
    $region103: #{forward.1} parent=1 // pred_check_branch
      %198 = sbr.rel (0) target = $region105
    $region104: #{forward.1} parent=1 // pred_region
      %200 = dma.done [#allocation5], 1024
    $region105: #{forward.1} parent=1 // pred_fallthru
      _
    // Predicated region
    $region106: #{forward.1} parent=1 // pred_check
      _
    $region107: #{forward.1} parent=1 // pred_check_branch
      %202 = sbr.rel (0) target = $region109
    $region108: #{forward.1} parent=1 // pred_region
      %204 = dma.done [#allocation5], 1024
    $region109: #{forward.1} parent=1 // pred_fallthru
      _
    // Predicated region
    $region110: #{forward.1} parent=1 // pred_check
      _
    $region111: #{forward.1} parent=1 // pred_check_branch
      %206 = sbr.rel (0) target = $region113
    $region112: #{forward.1} parent=1 // pred_region
      %208 = dma.done [#allocation8], 2048
    $region113: #{forward.1} parent=1 // pred_fallthru
      _
    // Predicated region
    $region114: #{forward.1} parent=1 // pred_check
      _
    $region115: #{forward.1} parent=1 // pred_check_branch
      %210 = sbr.rel (0) target = $region117
    $region116: #{forward.1} parent=1 // pred_region
      %212 = dma.done [#allocation8], 1024
    $region117: #{forward.1} parent=1 // pred_fallthru
      _
    // Predicated region
    $region118: #{forward.1} parent=1 // pred_check
      _
    $region119: #{forward.1} parent=1 // pred_check_branch
      %214 = sbr.rel (0) target = $region121
    $region120: #{forward.1} parent=1 // pred_region
      %216 = dma.done [#allocation11], 1024
    $region121: #{forward.1} parent=1 // pred_fallthru
      _
    // Predicated region
    $region122: #{forward.1} parent=1 // pred_check
      _
    $region123: #{forward.1} parent=1 // pred_check_branch
      %218 = sbr.rel (0) target = $region125
    $region124: #{forward.1} parent=1 // pred_region
      %220 = dma.done [#allocation11], 1024
    $region125: #{forward.1} parent=1 // pred_fallthru
      _
    // Predicated region
    $region126: #{forward.1} parent=1 // pred_check
      _
    $region127: #{forward.1} parent=1 // pred_check_branch
      %222 = sbr.rel (0) target = $region129
    $region128: #{forward.1} parent=1 // pred_region
      %224 = dma.done [#allocation14], 1024
    $region129: #{forward.1} parent=1 // pred_fallthru
      _
    // Predicated region
    $region130: #{forward.1} parent=1 // pred_check
      _
    $region131: #{forward.1} parent=1 // pred_check_branch
      %226 = sbr.rel (0) target = $region133
    $region132: #{forward.1} parent=1 // pred_region
      %228 = dma.done [#allocation14], 1024
    $region133: #{forward.1} parent=1 // pred_fallthru
      _
    // Predicated region
    $region134: #{forward.1} parent=1 // pred_check
      _
    $region135: #{forward.1} parent=1 // pred_check_branch
      %230 = sbr.rel (0) target = $region137
    $region136: #{forward.1} parent=1 // pred_region
      %232 = dma.done [#allocation17], 1024
    $region137: #{forward.1} parent=1 // pred_fallthru
      _
    %v233 = vld [vmem:[%s0] sm:$0xff]
    %v234 = vpack.c.bf16 %v233, %v233
    %v235 = vld [vmem:[#allocation2] sm:$0xf]
    %v236 = vld [vmem:[#allocation2 + $0x4] sm:$0xf]
    %v237 = vld [vmem:[#allocation2 + $0x8] sm:$0xf]
    %v238 = vld [vmem:[#allocation2 + $0xc] sm:$0xf]
    %v239 = vld [vmem:[#allocation2 + $0x10] sm:$0xf]
    %v240 = vld [vmem:[#allocation2 + $0x14] sm:$0xf]
    %v241 = vld [vmem:[#allocation2 + $0x18] sm:$0xf]
    %v242 = vld [vmem:[#allocation2 + $0x1c] sm:$0xf]
    %v243 = vld [vmem:[#allocation2 + $0x20] sm:$0xf]
    %v244 = vld [vmem:[#allocation2 + $0x24] sm:$0xf]
    %v245 = vld [vmem:[#allocation2 + $0x28] sm:$0xf]
    %v246 = vld [vmem:[#allocation2 + $0x2c] sm:$0xf]
    %v247 = vld [vmem:[#allocation2 + $0x30] sm:$0xf]
    %v248 = vld [vmem:[#allocation2 + $0x34] sm:$0xf]
    %v249 = vld [vmem:[#allocation2 + $0x38] sm:$0xf]
    %v250 = vld [vmem:[#allocation2 + $0x3c] sm:$0xf]
    %v267 = vunpack.c.l.b16 %v235
    %v268 = vunpack.c.l.b16 %v236
    %v269 = vunpack.c.l.b16 %v237
    %v270 = vunpack.c.l.b16 %v238
    %v271 = vunpack.c.l.b16 %v239
    %v272 = vunpack.c.l.b16 %v240
    %v273 = vunpack.c.l.b16 %v241
    %v274 = vunpack.c.l.b16 %v242
    %v275 = vunpack.c.l.b16 %v243
    %v276 = vunpack.c.l.b16 %v244
    %v277 = vunpack.c.l.b16 %v245
    %v278 = vunpack.c.l.b16 %v246
    %v279 = vunpack.c.l.b16 %v247
    %v280 = vunpack.c.l.b16 %v248
    %v281 = vunpack.c.l.b16 %v249
    %v282 = vunpack.c.l.b16 %v250
    %v283 = vpack.c.b16 %v268, %v267
    %v284 = vpack.c.b16 %v270, %v269
    %v285 = vpack.c.b16 %v272, %v271
    %v286 = vpack.c.b16 %v274, %v273
    %v287 = vpack.c.b16 %v276, %v275
    %v288 = vpack.c.b16 %v278, %v277
    %v289 = vpack.c.b16 %v280, %v279
    %v290 = vpack.c.b16 %v282, %v281
    %299 = vmatpush.bf16.msra.mxu0 %v290
    %300 = vmatpush.bf16.msra.mxu0 %v289
    %301 = vmatpush.bf16.msra.mxu0 %v288
    %302 = vmatpush.bf16.msra.mxu0 %v287
    %303 = vmatpush.bf16.msra.mxu0 %v286
    %304 = vmatpush.bf16.msra.mxu0 %v285
    %305 = vmatpush.bf16.msra.mxu0 %v284
    %306 = vmatpush.bf16.msra.mxu0 %v283
    %307 = vmatmul.bf16.gmra.mxu0 %v234
    %v308 = vpop.f32.mrf.mxu0
    %v309 = vadd.f32 0.0, %v308
    %v310 = vpop.f32.mrf.mxu0
    %311 = vdwg.mxu0
    %vm312 = vcmp.ge.f32.partialorder %v309, 0.0
    %v313 = vmul.f32 %v309, 0.01
    %v314 = vsel %vm312, %v309, %v313
    %v315 = vld [vmem:[%s3] sm:$0x1]
    %v317 = vperm.slane %v315, 0
    %v319 = vmul.f32 %v314, %v317
    %v320 = vld [vmem:[%s4] sm:$0x1]
    %v322 = vperm.slane %v320, 0
    %v324 = vadd.f32 %v319, %v322
    %v325 = vpack.c.bf16 %v324, %v324
    %v326 = vld [vmem:[#allocation4] sm:$0xf]
    %v327 = vld [vmem:[#allocation4 + $0x4] sm:$0xf]
    %v328 = vld [vmem:[#allocation4 + $0x8] sm:$0xf]
    %v329 = vld [vmem:[#allocation4 + $0xc] sm:$0xf]
    %v330 = vld [vmem:[#allocation4 + $0x10] sm:$0xf]
    %v331 = vld [vmem:[#allocation4 + $0x14] sm:$0xf]
    %v332 = vld [vmem:[#allocation4 + $0x18] sm:$0xf]
    %v333 = vld [vmem:[#allocation4 + $0x1c] sm:$0xf]
    %v334 = vld [vmem:[#allocation4 + $0x20] sm:$0xf]
    %v335 = vld [vmem:[#allocation4 + $0x24] sm:$0xf]
    %v336 = vld [vmem:[#allocation4 + $0x28] sm:$0xf]
    %v337 = vld [vmem:[#allocation4 + $0x2c] sm:$0xf]
    %v338 = vld [vmem:[#allocation4 + $0x30] sm:$0xf]
    %v339 = vld [vmem:[#allocation4 + $0x34] sm:$0xf]
    %v340 = vld [vmem:[#allocation4 + $0x38] sm:$0xf]
    %v341 = vld [vmem:[#allocation4 + $0x3c] sm:$0xf]
    %v358 = vunpack.c.l.b16 %v326
    %v359 = vunpack.c.l.b16 %v327
    %v360 = vunpack.c.l.b16 %v328
    %v361 = vunpack.c.l.b16 %v329
    %v362 = vunpack.c.l.b16 %v330
    %v363 = vunpack.c.l.b16 %v331
    %v364 = vunpack.c.l.b16 %v332
    %v365 = vunpack.c.l.b16 %v333
    %v366 = vunpack.c.l.b16 %v334
    %v367 = vunpack.c.l.b16 %v335
    %v368 = vunpack.c.l.b16 %v336
    %v369 = vunpack.c.l.b16 %v337
    %v370 = vunpack.c.l.b16 %v338
    %v371 = vunpack.c.l.b16 %v339
    %v372 = vunpack.c.l.b16 %v340
    %v373 = vunpack.c.l.b16 %v341
    %v374 = vpack.c.b16 %v359, %v358
    %v375 = vpack.c.b16 %v361, %v360
    %v376 = vpack.c.b16 %v363, %v362
    %v377 = vpack.c.b16 %v365, %v364
    %v378 = vpack.c.b16 %v367, %v366
    %v379 = vpack.c.b16 %v369, %v368
    %v380 = vpack.c.b16 %v371, %v370
    %v381 = vpack.c.b16 %v373, %v372
    %390 = vmatpush.bf16.msra.mxu0 %v381
    %391 = vmatpush.bf16.msra.mxu0 %v380
    %392 = vmatpush.bf16.msra.mxu0 %v379
    %393 = vmatpush.bf16.msra.mxu0 %v378
    %394 = vmatpush.bf16.msra.mxu0 %v377
    %395 = vmatpush.bf16.msra.mxu0 %v376
    %396 = vmatpush.bf16.msra.mxu0 %v375
    %397 = vmatpush.bf16.msra.mxu0 %v374
    %398 = vmatmul.bf16.gmra.mxu0 %v325
    %v399 = vpop.f32.mrf.mxu0
    %v400 = vadd.f32 0.0, %v399
    %v401 = vpop.f32.mrf.mxu0
    %402 = vdwg.mxu0
    %vm403 = vcmp.ge.f32.partialorder %v400, 0.0
    %v404 = vmul.f32 %v400, 0.01
    %v405 = vsel %vm403, %v400, %v404
    %v406 = vpack.c.bf16 %v405, %v405
    %v407 = vld [vmem:[#allocation6] sm:$0xf]
    %v408 = vld [vmem:[#allocation6 + $0x4] sm:$0xf]
    %v409 = vld [vmem:[#allocation6 + $0x8] sm:$0xf]
    %v410 = vld [vmem:[#allocation6 + $0xc] sm:$0xf]
    %v411 = vld [vmem:[#allocation6 + $0x10] sm:$0xf]
    %v412 = vld [vmem:[#allocation6 + $0x14] sm:$0xf]
    %v413 = vld [vmem:[#allocation6 + $0x18] sm:$0xf]
    %v414 = vld [vmem:[#allocation6 + $0x1c] sm:$0xf]
    %v415 = vld [vmem:[#allocation6 + $0x20] sm:$0xf]
    %v416 = vld [vmem:[#allocation6 + $0x24] sm:$0xf]
    %v417 = vld [vmem:[#allocation6 + $0x28] sm:$0xf]
    %v418 = vld [vmem:[#allocation6 + $0x2c] sm:$0xf]
    %v419 = vld [vmem:[#allocation6 + $0x30] sm:$0xf]
    %v420 = vld [vmem:[#allocation6 + $0x34] sm:$0xf]
    %v421 = vld [vmem:[#allocation6 + $0x38] sm:$0xf]
    %v422 = vld [vmem:[#allocation6 + $0x3c] sm:$0xf]
    %v439 = vunpack.c.l.b16 %v407
    %v440 = vunpack.c.l.b16 %v408
    %v441 = vunpack.c.l.b16 %v409
    %v442 = vunpack.c.l.b16 %v410
    %v443 = vunpack.c.l.b16 %v411
    %v444 = vunpack.c.l.b16 %v412
    %v445 = vunpack.c.l.b16 %v413
    %v446 = vunpack.c.l.b16 %v414
    %v447 = vunpack.c.l.b16 %v415
    %v448 = vunpack.c.l.b16 %v416
    %v449 = vunpack.c.l.b16 %v417
    %v450 = vunpack.c.l.b16 %v418
    %v451 = vunpack.c.l.b16 %v419
    %v452 = vunpack.c.l.b16 %v420
    %v453 = vunpack.c.l.b16 %v421
    %v454 = vunpack.c.l.b16 %v422
    %v455 = vpack.c.b16 %v440, %v439
    %v456 = vpack.c.b16 %v442, %v441
    %v457 = vpack.c.b16 %v444, %v443
    %v458 = vpack.c.b16 %v446, %v445
    %v459 = vpack.c.b16 %v448, %v447
    %v460 = vpack.c.b16 %v450, %v449
    %v461 = vpack.c.b16 %v452, %v451
    %v462 = vpack.c.b16 %v454, %v453
    %471 = vmatpush.bf16.msra.mxu0 %v462
    %472 = vmatpush.bf16.msra.mxu0 %v461
    %473 = vmatpush.bf16.msra.mxu0 %v460
    %474 = vmatpush.bf16.msra.mxu0 %v459
    %475 = vmatpush.bf16.msra.mxu0 %v458
    %476 = vmatpush.bf16.msra.mxu0 %v457
    %477 = vmatpush.bf16.msra.mxu0 %v456
    %478 = vmatpush.bf16.msra.mxu0 %v455
    %479 = vmatmul.bf16.gmra.mxu0 %v406
    %v480 = vpop.f32.mrf.mxu0
    %v481 = vadd.f32 0.0, %v480
    %v482 = vpop.f32.mrf.mxu0
    %483 = vdwg.mxu0
    %v484 = vld [vmem:[%s7] sm:$0x1]
    %v486 = vperm.slane %v484, 0
    %v488 = vmul.f32 %v481, %v486
    %v489 = vld [vmem:[%s8] sm:$0x1]
    %v491 = vperm.slane %v489, 0
    %v493 = vadd.f32 %v488, %v491
    %vm494 = vcmp.ge.f32.partialorder %v493, 0.0
    %v495 = vmul.f32 %v493, 0.01
    %v496 = vsel %vm494, %v493, %v495
    %v497 = vpack.c.bf16 %v496, %v496
    %v498 = vld [vmem:[#allocation7] sm:$0xff]
    %v499 = vld [vmem:[#allocation7 + $0x8] sm:$0xff]
    %v500 = vld [vmem:[#allocation7 + $0x10] sm:$0xff]
    %v501 = vld [vmem:[#allocation7 + $0x18] sm:$0xff]
    %v502 = vld [vmem:[#allocation7 + $0x20] sm:$0xff]
    %v503 = vld [vmem:[#allocation7 + $0x28] sm:$0xff]
    %v504 = vld [vmem:[#allocation7 + $0x30] sm:$0xff]
    %v505 = vld [vmem:[#allocation7 + $0x38] sm:$0xff]
    %v506 = vld [vmem:[#allocation7 + $0x40] sm:$0xff]
    %v507 = vld [vmem:[#allocation7 + $0x48] sm:$0xff]
    %v508 = vld [vmem:[#allocation7 + $0x50] sm:$0xff]
    %v509 = vld [vmem:[#allocation7 + $0x58] sm:$0xff]
    %v510 = vld [vmem:[#allocation7 + $0x60] sm:$0xff]
    %v511 = vld [vmem:[#allocation7 + $0x68] sm:$0xff]
    %v512 = vld [vmem:[#allocation7 + $0x70] sm:$0xff]
    %v513 = vld [vmem:[#allocation7 + $0x78] sm:$0xff]
    %v514 = vld [vmem:[%s10] sm:$0x3]
    %v516 = vperm.slane %v514, 0
    %v517 = vperm.slane %v514, 1
    %v536 = vunpack.c.l.b16 %v498
    %v537 = vunpack.c.h.b16 %v498
    %v538 = vunpack.c.l.b16 %v499
    %v539 = vunpack.c.h.b16 %v499
    %v540 = vunpack.c.l.b16 %v500
    %v541 = vunpack.c.h.b16 %v500
    %v542 = vunpack.c.l.b16 %v501
    %v543 = vunpack.c.h.b16 %v501
    %v544 = vunpack.c.l.b16 %v502
    %v545 = vunpack.c.h.b16 %v502
    %v546 = vunpack.c.l.b16 %v503
    %v547 = vunpack.c.h.b16 %v503
    %v548 = vunpack.c.l.b16 %v504
    %v549 = vunpack.c.h.b16 %v504
    %v550 = vunpack.c.l.b16 %v505
    %v551 = vunpack.c.h.b16 %v505
    %v552 = vunpack.c.l.b16 %v506
    %v553 = vunpack.c.h.b16 %v506
    %v554 = vunpack.c.l.b16 %v507
    %v555 = vunpack.c.h.b16 %v507
    %v556 = vunpack.c.l.b16 %v508
    %v557 = vunpack.c.h.b16 %v508
    %v558 = vunpack.c.l.b16 %v509
    %v559 = vunpack.c.h.b16 %v509
    %v560 = vunpack.c.l.b16 %v510
    %v561 = vunpack.c.h.b16 %v510
    %v562 = vunpack.c.l.b16 %v511
    %v563 = vunpack.c.h.b16 %v511
    %v564 = vunpack.c.l.b16 %v512
    %v565 = vunpack.c.h.b16 %v512
    %v566 = vunpack.c.l.b16 %v513
    %v567 = vunpack.c.h.b16 %v513
    %v568 = vpack.c.b16 %v538, %v536
    %v569 = vpack.c.b16 %v539, %v537
    %v570 = vpack.c.b16 %v542, %v540
    %v571 = vpack.c.b16 %v543, %v541
    %v572 = vpack.c.b16 %v546, %v544
    %v573 = vpack.c.b16 %v547, %v545
    %v574 = vpack.c.b16 %v550, %v548
    %v575 = vpack.c.b16 %v551, %v549
    %v576 = vpack.c.b16 %v554, %v552
    %v577 = vpack.c.b16 %v555, %v553
    %v578 = vpack.c.b16 %v558, %v556
    %v579 = vpack.c.b16 %v559, %v557
    %v580 = vpack.c.b16 %v562, %v560
    %v581 = vpack.c.b16 %v563, %v561
    %v582 = vpack.c.b16 %v566, %v564
    %v583 = vpack.c.b16 %v567, %v565
    %600 = vmatpush.bf16.msra.mxu0 %v582
    %601 = vmatpush.bf16.msra.mxu0 %v580
    %602 = vmatpush.bf16.msra.mxu0 %v578
    %603 = vmatpush.bf16.msra.mxu0 %v576
    %604 = vmatpush.bf16.msra.mxu0 %v574
    %605 = vmatpush.bf16.msra.mxu0 %v572
    %606 = vmatpush.bf16.msra.mxu0 %v570
    %607 = vmatpush.bf16.msra.mxu0 %v568
    %608 = vmatmul.bf16.gmra.mxu0 %v497
    %v609 = vpop.f32.mrf.mxu0
    %v610 = vadd.f32 %v516, %v609
    %v611 = vpop.f32.mrf.mxu0
    %612 = vdwg.mxu0
    %613 = vmatpush.bf16.msra.mxu0 %v583
    %614 = vmatpush.bf16.msra.mxu0 %v581
    %615 = vmatpush.bf16.msra.mxu0 %v579
    %616 = vmatpush.bf16.msra.mxu0 %v577
    %617 = vmatpush.bf16.msra.mxu0 %v575
    %618 = vmatpush.bf16.msra.mxu0 %v573
    %619 = vmatpush.bf16.msra.mxu0 %v571
    %620 = vmatpush.bf16.msra.mxu0 %v569
    %621 = vmatmul.bf16.gmra.mxu0 %v497
    %v622 = vpop.f32.mrf.mxu0
    %v623 = vadd.f32 %v517, %v622
    %v624 = vpop.f32.mrf.mxu0
    %625 = vdwg.mxu0
    %v626 = vld [vmem:[%s1] sm:$0xff]
    %v627 = vmul.f32 %v623, 0.5
    %v628 = vmul.f32 %v627, 1.442695
    %v629 = vpow.pop %v628
    %v630 = vmul.f32 %v626, %v629
    %v631 = vadd.f32 %v610, %v630
    %v632 = vpack.c.bf16 %v631, %v631
    %v633 = vld [vmem:[#allocation9] sm:$0xf]
    %v634 = vld [vmem:[#allocation9 + $0x4] sm:$0xf]
    %v635 = vld [vmem:[#allocation9 + $0x8] sm:$0xf]
    %v636 = vld [vmem:[#allocation9 + $0xc] sm:$0xf]
    %v637 = vld [vmem:[#allocation9 + $0x10] sm:$0xf]
    %v638 = vld [vmem:[#allocation9 + $0x14] sm:$0xf]
    %v639 = vld [vmem:[#allocation9 + $0x18] sm:$0xf]
    %v640 = vld [vmem:[#allocation9 + $0x1c] sm:$0xf]
    %v641 = vld [vmem:[#allocation9 + $0x20] sm:$0xf]
    %v642 = vld [vmem:[#allocation9 + $0x24] sm:$0xf]
    %v643 = vld [vmem:[#allocation9 + $0x28] sm:$0xf]
    %v644 = vld [vmem:[#allocation9 + $0x2c] sm:$0xf]
    %v645 = vld [vmem:[#allocation9 + $0x30] sm:$0xf]
    %v646 = vld [vmem:[#allocation9 + $0x34] sm:$0xf]
    %v647 = vld [vmem:[#allocation9 + $0x38] sm:$0xf]
    %v648 = vld [vmem:[#allocation9 + $0x3c] sm:$0xf]
    %v649 = vld [vmem:[%s12] sm:$0x1]
    %v651 = vperm.slane %v649, 0
    %v669 = vunpack.c.l.b16 %v633
    %v670 = vunpack.c.l.b16 %v634
    %v671 = vunpack.c.l.b16 %v635
    %v672 = vunpack.c.l.b16 %v636
    %v673 = vunpack.c.l.b16 %v637
    %v674 = vunpack.c.l.b16 %v638
    %v675 = vunpack.c.l.b16 %v639
    %v676 = vunpack.c.l.b16 %v640
    %v677 = vunpack.c.l.b16 %v641
    %v678 = vunpack.c.l.b16 %v642
    %v679 = vunpack.c.l.b16 %v643
    %v680 = vunpack.c.l.b16 %v644
    %v681 = vunpack.c.l.b16 %v645
    %v682 = vunpack.c.l.b16 %v646
    %v683 = vunpack.c.l.b16 %v647
    %v684 = vunpack.c.l.b16 %v648
    %v685 = vpack.c.b16 %v670, %v669
    %v686 = vpack.c.b16 %v672, %v671
    %v687 = vpack.c.b16 %v674, %v673
    %v688 = vpack.c.b16 %v676, %v675
    %v689 = vpack.c.b16 %v678, %v677
    %v690 = vpack.c.b16 %v680, %v679
    %v691 = vpack.c.b16 %v682, %v681
    %v692 = vpack.c.b16 %v684, %v683
    %701 = vmatpush.bf16.msra.mxu0 %v692
    %702 = vmatpush.bf16.msra.mxu0 %v691
    %703 = vmatpush.bf16.msra.mxu0 %v690
    %704 = vmatpush.bf16.msra.mxu0 %v689
    %705 = vmatpush.bf16.msra.mxu0 %v688
    %706 = vmatpush.bf16.msra.mxu0 %v687
    %707 = vmatpush.bf16.msra.mxu0 %v686
    %708 = vmatpush.bf16.msra.mxu0 %v685
    %709 = vmatmul.bf16.gmra.mxu0 %v632
    %v710 = vpop.f32.mrf.mxu0
    %v711 = vadd.f32 %v651, %v710
    %v712 = vpop.f32.mrf.mxu0
    %713 = vdwg.mxu0
    %v714 = vpack.c.bf16 %v711, %v711
    %v715 = vld [vmem:[#allocation10] sm:$0xf]
    %v716 = vld [vmem:[#allocation10 + $0x4] sm:$0xf]
    %v717 = vld [vmem:[#allocation10 + $0x8] sm:$0xf]
    %v718 = vld [vmem:[#allocation10 + $0xc] sm:$0xf]
    %v719 = vld [vmem:[#allocation10 + $0x10] sm:$0xf]
    %v720 = vld [vmem:[#allocation10 + $0x14] sm:$0xf]
    %v721 = vld [vmem:[#allocation10 + $0x18] sm:$0xf]
    %v722 = vld [vmem:[#allocation10 + $0x1c] sm:$0xf]
    %v723 = vld [vmem:[#allocation10 + $0x20] sm:$0xf]
    %v724 = vld [vmem:[#allocation10 + $0x24] sm:$0xf]
    %v725 = vld [vmem:[#allocation10 + $0x28] sm:$0xf]
    %v726 = vld [vmem:[#allocation10 + $0x2c] sm:$0xf]
    %v727 = vld [vmem:[#allocation10 + $0x30] sm:$0xf]
    %v728 = vld [vmem:[#allocation10 + $0x34] sm:$0xf]
    %v729 = vld [vmem:[#allocation10 + $0x38] sm:$0xf]
    %v730 = vld [vmem:[#allocation10 + $0x3c] sm:$0xf]
    %v731 = vld [vmem:[%s14] sm:$0x1]
    %v733 = vperm.slane %v731, 0
    %v751 = vunpack.c.l.b16 %v715
    %v752 = vunpack.c.l.b16 %v716
    %v753 = vunpack.c.l.b16 %v717
    %v754 = vunpack.c.l.b16 %v718
    %v755 = vunpack.c.l.b16 %v719
    %v756 = vunpack.c.l.b16 %v720
    %v757 = vunpack.c.l.b16 %v721
    %v758 = vunpack.c.l.b16 %v722
    %v759 = vunpack.c.l.b16 %v723
    %v760 = vunpack.c.l.b16 %v724
    %v761 = vunpack.c.l.b16 %v725
    %v762 = vunpack.c.l.b16 %v726
    %v763 = vunpack.c.l.b16 %v727
    %v764 = vunpack.c.l.b16 %v728
    %v765 = vunpack.c.l.b16 %v729
    %v766 = vunpack.c.l.b16 %v730
    %v767 = vpack.c.b16 %v752, %v751
    %v768 = vpack.c.b16 %v754, %v753
    %v769 = vpack.c.b16 %v756, %v755
    %v770 = vpack.c.b16 %v758, %v757
    %v771 = vpack.c.b16 %v760, %v759
    %v772 = vpack.c.b16 %v762, %v761
    %v773 = vpack.c.b16 %v764, %v763
    %v774 = vpack.c.b16 %v766, %v765
    %783 = vmatpush.bf16.msra.mxu0 %v774
    %784 = vmatpush.bf16.msra.mxu0 %v773
    %785 = vmatpush.bf16.msra.mxu0 %v772
    %786 = vmatpush.bf16.msra.mxu0 %v771
    %787 = vmatpush.bf16.msra.mxu0 %v770
    %788 = vmatpush.bf16.msra.mxu0 %v769
    %789 = vmatpush.bf16.msra.mxu0 %v768
    %790 = vmatpush.bf16.msra.mxu0 %v767
    %791 = vmatmul.bf16.gmra.mxu0 %v714
    %v792 = vpop.f32.mrf.mxu0
    %v793 = vadd.f32 %v733, %v792
    %v794 = vpop.f32.mrf.mxu0
    %795 = vdwg.mxu0
    %v796 = vsub.f32 0.0, %v793
    %v797 = vmul.f32 %v796, 1.442695
    %v798 = vpow.pop %v797
    %v799 = vadd.f32 %v798, 1.0
    %v800 = vrcp.pop %v799
    %v801 = vld [vmem:[#allocation12] sm:$0xf]
    %v802 = vld [vmem:[#allocation12 + $0x4] sm:$0xf]
    %v803 = vld [vmem:[#allocation12 + $0x8] sm:$0xf]
    %v804 = vld [vmem:[#allocation12 + $0xc] sm:$0xf]
    %v805 = vld [vmem:[#allocation12 + $0x10] sm:$0xf]
    %v806 = vld [vmem:[#allocation12 + $0x14] sm:$0xf]
    %v807 = vld [vmem:[#allocation12 + $0x18] sm:$0xf]
    %v808 = vld [vmem:[#allocation12 + $0x1c] sm:$0xf]
    %v809 = vld [vmem:[#allocation12 + $0x20] sm:$0xf]
    %v810 = vld [vmem:[#allocation12 + $0x24] sm:$0xf]
    %v811 = vld [vmem:[#allocation12 + $0x28] sm:$0xf]
    %v812 = vld [vmem:[#allocation12 + $0x2c] sm:$0xf]
    %v813 = vld [vmem:[#allocation12 + $0x30] sm:$0xf]
    %v814 = vld [vmem:[#allocation12 + $0x34] sm:$0xf]
    %v815 = vld [vmem:[#allocation12 + $0x38] sm:$0xf]
    %v816 = vld [vmem:[#allocation12 + $0x3c] sm:$0xf]
    %v817 = vld [vmem:[%s16] sm:$0x1]
    %v819 = vperm.slane %v817, 0
    %v837 = vunpack.c.l.b16 %v801
    %v838 = vunpack.c.l.b16 %v802
    %v839 = vunpack.c.l.b16 %v803
    %v840 = vunpack.c.l.b16 %v804
    %v841 = vunpack.c.l.b16 %v805
    %v842 = vunpack.c.l.b16 %v806
    %v843 = vunpack.c.l.b16 %v807
    %v844 = vunpack.c.l.b16 %v808
    %v845 = vunpack.c.l.b16 %v809
    %v846 = vunpack.c.l.b16 %v810
    %v847 = vunpack.c.l.b16 %v811
    %v848 = vunpack.c.l.b16 %v812
    %v849 = vunpack.c.l.b16 %v813
    %v850 = vunpack.c.l.b16 %v814
    %v851 = vunpack.c.l.b16 %v815
    %v852 = vunpack.c.l.b16 %v816
    %v853 = vpack.c.b16 %v838, %v837
    %v854 = vpack.c.b16 %v840, %v839
    %v855 = vpack.c.b16 %v842, %v841
    %v856 = vpack.c.b16 %v844, %v843
    %v857 = vpack.c.b16 %v846, %v845
    %v858 = vpack.c.b16 %v848, %v847
    %v859 = vpack.c.b16 %v850, %v849
    %v860 = vpack.c.b16 %v852, %v851
    %869 = vmatpush.bf16.msra.mxu0 %v860
    %870 = vmatpush.bf16.msra.mxu0 %v859
    %871 = vmatpush.bf16.msra.mxu0 %v858
    %872 = vmatpush.bf16.msra.mxu0 %v857
    %873 = vmatpush.bf16.msra.mxu0 %v856
    %874 = vmatpush.bf16.msra.mxu0 %v855
    %875 = vmatpush.bf16.msra.mxu0 %v854
    %876 = vmatpush.bf16.msra.mxu0 %v853
    %877 = vmatmul.bf16.gmra.mxu0 %v632
    %v878 = vpop.f32.mrf.mxu0
    %v879 = vadd.f32 %v819, %v878
    %v880 = vpop.f32.mrf.mxu0
    %881 = vdwg.mxu0
    %v882 = vpack.c.bf16 %v879, %v879
    %v883 = vld [vmem:[#allocation13] sm:$0xf]
    %v884 = vld [vmem:[#allocation13 + $0x4] sm:$0xf]
    %v885 = vld [vmem:[#allocation13 + $0x8] sm:$0xf]
    %v886 = vld [vmem:[#allocation13 + $0xc] sm:$0xf]
    %v887 = vld [vmem:[#allocation13 + $0x10] sm:$0xf]
    %v888 = vld [vmem:[#allocation13 + $0x14] sm:$0xf]
    %v889 = vld [vmem:[#allocation13 + $0x18] sm:$0xf]
    %v890 = vld [vmem:[#allocation13 + $0x1c] sm:$0xf]
    %v891 = vld [vmem:[#allocation13 + $0x20] sm:$0xf]
    %v892 = vld [vmem:[#allocation13 + $0x24] sm:$0xf]
    %v893 = vld [vmem:[#allocation13 + $0x28] sm:$0xf]
    %v894 = vld [vmem:[#allocation13 + $0x2c] sm:$0xf]
    %v895 = vld [vmem:[#allocation13 + $0x30] sm:$0xf]
    %v896 = vld [vmem:[#allocation13 + $0x34] sm:$0xf]
    %v897 = vld [vmem:[#allocation13 + $0x38] sm:$0xf]
    %v898 = vld [vmem:[#allocation13 + $0x3c] sm:$0xf]
    %v915 = vunpack.c.l.b16 %v883
    %v916 = vunpack.c.l.b16 %v884
    %v917 = vunpack.c.l.b16 %v885
    %v918 = vunpack.c.l.b16 %v886
    %v919 = vunpack.c.l.b16 %v887
    %v920 = vunpack.c.l.b16 %v888
    %v921 = vunpack.c.l.b16 %v889
    %v922 = vunpack.c.l.b16 %v890
    %v923 = vunpack.c.l.b16 %v891
    %v924 = vunpack.c.l.b16 %v892
    %v925 = vunpack.c.l.b16 %v893
    %v926 = vunpack.c.l.b16 %v894
    %v927 = vunpack.c.l.b16 %v895
    %v928 = vunpack.c.l.b16 %v896
    %v929 = vunpack.c.l.b16 %v897
    %v930 = vunpack.c.l.b16 %v898
    %v931 = vpack.c.b16 %v916, %v915
    %v932 = vpack.c.b16 %v918, %v917
    %v933 = vpack.c.b16 %v920, %v919
    %v934 = vpack.c.b16 %v922, %v921
    %v935 = vpack.c.b16 %v924, %v923
    %v936 = vpack.c.b16 %v926, %v925
    %v937 = vpack.c.b16 %v928, %v927
    %v938 = vpack.c.b16 %v930, %v929
    %947 = vmatpush.bf16.msra.mxu0 %v938
    %948 = vmatpush.bf16.msra.mxu0 %v937
    %949 = vmatpush.bf16.msra.mxu0 %v936
    %950 = vmatpush.bf16.msra.mxu0 %v935
    %951 = vmatpush.bf16.msra.mxu0 %v934
    %952 = vmatpush.bf16.msra.mxu0 %v933
    %953 = vmatpush.bf16.msra.mxu0 %v932
    %954 = vmatpush.bf16.msra.mxu0 %v931
    %955 = vmatmul.bf16.gmra.mxu0 %v882
    %v956 = vpop.f32.mrf.mxu0
    %v957 = vadd.f32 0.0, %v956
    %v958 = vpop.f32.mrf.mxu0
    %959 = vdwg.mxu0
    %v960 = vld [vmem:[%s18] sm:$0x1]
    %v962 = vperm.slane %v960, 0
    %v964 = vmul.f32 %v957, %v962
    %v965 = vld [vmem:[%s19] sm:$0x1]
    %v967 = vperm.slane %v965, 0
    %v969 = vadd.f32 %v964, %v967
    %vm970 = vcmp.ge.f32.partialorder %v969, 0.0
    %v971 = vmul.f32 %v969, 0.01
    %v972 = vsel %vm970, %v969, %v971
    %v973 = vpack.c.bf16 %v972, %v972
    %v974 = vld [vmem:[#allocation15] sm:$0xf]
    %v975 = vld [vmem:[#allocation15 + $0x4] sm:$0xf]
    %v976 = vld [vmem:[#allocation15 + $0x8] sm:$0xf]
    %v977 = vld [vmem:[#allocation15 + $0xc] sm:$0xf]
    %v978 = vld [vmem:[#allocation15 + $0x10] sm:$0xf]
    %v979 = vld [vmem:[#allocation15 + $0x14] sm:$0xf]
    %v980 = vld [vmem:[#allocation15 + $0x18] sm:$0xf]
    %v981 = vld [vmem:[#allocation15 + $0x1c] sm:$0xf]
    %v982 = vld [vmem:[#allocation15 + $0x20] sm:$0xf]
    %v983 = vld [vmem:[#allocation15 + $0x24] sm:$0xf]
    %v984 = vld [vmem:[#allocation15 + $0x28] sm:$0xf]
    %v985 = vld [vmem:[#allocation15 + $0x2c] sm:$0xf]
    %v986 = vld [vmem:[#allocation15 + $0x30] sm:$0xf]
    %v987 = vld [vmem:[#allocation15 + $0x34] sm:$0xf]
    %v988 = vld [vmem:[#allocation15 + $0x38] sm:$0xf]
    %v989 = vld [vmem:[#allocation15 + $0x3c] sm:$0xf]
    %v1006 = vunpack.c.l.b16 %v974
    %v1007 = vunpack.c.l.b16 %v975
    %v1008 = vunpack.c.l.b16 %v976
    %v1009 = vunpack.c.l.b16 %v977
    %v1010 = vunpack.c.l.b16 %v978
    %v1011 = vunpack.c.l.b16 %v979
    %v1012 = vunpack.c.l.b16 %v980
    %v1013 = vunpack.c.l.b16 %v981
    %v1014 = vunpack.c.l.b16 %v982
    %v1015 = vunpack.c.l.b16 %v983
    %v1016 = vunpack.c.l.b16 %v984
    %v1017 = vunpack.c.l.b16 %v985
    %v1018 = vunpack.c.l.b16 %v986
    %v1019 = vunpack.c.l.b16 %v987
    %v1020 = vunpack.c.l.b16 %v988
    %v1021 = vunpack.c.l.b16 %v989
    %v1022 = vpack.c.b16 %v1007, %v1006
    %v1023 = vpack.c.b16 %v1009, %v1008
    %v1024 = vpack.c.b16 %v1011, %v1010
    %v1025 = vpack.c.b16 %v1013, %v1012
    %v1026 = vpack.c.b16 %v1015, %v1014
    %v1027 = vpack.c.b16 %v1017, %v1016
    %v1028 = vpack.c.b16 %v1019, %v1018
    %v1029 = vpack.c.b16 %v1021, %v1020
    %1038 = vmatpush.bf16.msra.mxu0 %v1029
    %1039 = vmatpush.bf16.msra.mxu0 %v1028
    %1040 = vmatpush.bf16.msra.mxu0 %v1027
    %1041 = vmatpush.bf16.msra.mxu0 %v1026
    %1042 = vmatpush.bf16.msra.mxu0 %v1025
    %1043 = vmatpush.bf16.msra.mxu0 %v1024
    %1044 = vmatpush.bf16.msra.mxu0 %v1023
    %1045 = vmatpush.bf16.msra.mxu0 %v1022
    %1046 = vmatmul.bf16.gmra.mxu0 %v973
    %v1047 = vpop.f32.mrf.mxu0
    %v1048 = vadd.f32 0.0, %v1047
    %v1049 = vpop.f32.mrf.mxu0
    %1050 = vdwg.mxu0
    %v1051 = vld [vmem:[%s21] sm:$0x1]
    %v1053 = vperm.slane %v1051, 0
    %v1055 = vmul.f32 %v1048, %v1053
    %v1056 = vld [vmem:[%s22] sm:$0x1]
    %v1058 = vperm.slane %v1056, 0
    %v1060 = vadd.f32 %v1055, %v1058
    %vm1061 = vcmp.ge.f32.partialorder %v1060, 0.0
    %v1062 = vmul.f32 %v1060, 0.01
    %v1063 = vsel %vm1061, %v1060, %v1062
    %v1064 = vpack.c.bf16 %v1063, %v1063
    %v1065 = vld [vmem:[#allocation16] sm:$0xf]
    %v1066 = vld [vmem:[#allocation16 + $0x4] sm:$0xf]
    %v1067 = vld [vmem:[#allocation16 + $0x8] sm:$0xf]
    %v1068 = vld [vmem:[#allocation16 + $0xc] sm:$0xf]
    %v1069 = vld [vmem:[#allocation16 + $0x10] sm:$0xf]
    %v1070 = vld [vmem:[#allocation16 + $0x14] sm:$0xf]
    %v1071 = vld [vmem:[#allocation16 + $0x18] sm:$0xf]
    %v1072 = vld [vmem:[#allocation16 + $0x1c] sm:$0xf]
    %v1073 = vld [vmem:[#allocation16 + $0x20] sm:$0xf]
    %v1074 = vld [vmem:[#allocation16 + $0x24] sm:$0xf]
    %v1075 = vld [vmem:[#allocation16 + $0x28] sm:$0xf]
    %v1076 = vld [vmem:[#allocation16 + $0x2c] sm:$0xf]
    %v1077 = vld [vmem:[#allocation16 + $0x30] sm:$0xf]
    %v1078 = vld [vmem:[#allocation16 + $0x34] sm:$0xf]
    %v1079 = vld [vmem:[#allocation16 + $0x38] sm:$0xf]
    %v1080 = vld [vmem:[#allocation16 + $0x3c] sm:$0xf]
    %v1097 = vunpack.c.l.b16 %v1065
    %v1098 = vunpack.c.l.b16 %v1066
    %v1099 = vunpack.c.l.b16 %v1067
    %v1100 = vunpack.c.l.b16 %v1068
    %v1101 = vunpack.c.l.b16 %v1069
    %v1102 = vunpack.c.l.b16 %v1070
    %v1103 = vunpack.c.l.b16 %v1071
    %v1104 = vunpack.c.l.b16 %v1072
    %v1105 = vunpack.c.l.b16 %v1073
    %v1106 = vunpack.c.l.b16 %v1074
    %v1107 = vunpack.c.l.b16 %v1075
    %v1108 = vunpack.c.l.b16 %v1076
    %v1109 = vunpack.c.l.b16 %v1077
    %v1110 = vunpack.c.l.b16 %v1078
    %v1111 = vunpack.c.l.b16 %v1079
    %v1112 = vunpack.c.l.b16 %v1080
    %v1113 = vpack.c.b16 %v1098, %v1097
    %v1114 = vpack.c.b16 %v1100, %v1099
    %v1115 = vpack.c.b16 %v1102, %v1101
    %v1116 = vpack.c.b16 %v1104, %v1103
    %v1117 = vpack.c.b16 %v1106, %v1105
    %v1118 = vpack.c.b16 %v1108, %v1107
    %v1119 = vpack.c.b16 %v1110, %v1109
    %v1120 = vpack.c.b16 %v1112, %v1111
    %1129 = vmatpush.bf16.msra.mxu0 %v1120
    %1130 = vmatpush.bf16.msra.mxu0 %v1119
    %1131 = vmatpush.bf16.msra.mxu0 %v1118
    %1132 = vmatpush.bf16.msra.mxu0 %v1117
    %1133 = vmatpush.bf16.msra.mxu0 %v1116
    %1134 = vmatpush.bf16.msra.mxu0 %v1115
    %1135 = vmatpush.bf16.msra.mxu0 %v1114
    %1136 = vmatpush.bf16.msra.mxu0 %v1113
    %1137 = vmatmul.bf16.gmra.mxu0 %v1064
    %v1138 = vpop.f32.mrf.mxu0
    %v1139 = vadd.f32 0.0, %v1138
    %v1140 = vpop.f32.mrf.mxu0
    %1141 = vdwg.mxu0
    %vm1142 = vcmp.ge.f32.partialorder %v1139, 0.0
    %v1143 = vmul.f32 %v1139, 0.01
    %v1144 = vsel %vm1142, %v1139, %v1143
    %v1145 = vsub.f32 0.0, %v1144
    %v1146 = vmul.f32 %v1145, 1.442695
    %v1147 = vpow.pop %v1146
    %v1148 = vadd.f32 %v1147, 1.0
    %v1149 = vrcp.pop %v1148
    %1150 = vst [vmem:[%s24] sm:$0xff] %v610
    %1151 = vst [vmem:[%s24 + $0x8] sm:$0xff] %v623
    %1152 = vst [vmem:[%s24 + $0x10] sm:$0xff] %v631
    %1153 = vst [vmem:[%s24 + $0x18] sm:$0xff] %v800
    %1154 = vst [vmem:[%s24 + $0x20] sm:$0xff] %v1149
    // Predicated region
    $region138: #{forward.1} parent=1 // pred_check
      _
    $region139: #{forward.1} parent=1 // pred_check_branch
      %1156 = sbr.rel (0) target = $region141
    $region140: #{forward.1} parent=1 // pred_region
      _
    $region141: #{forward.1} parent=1 // pred_fallthru
      _
    // Predicated region
    $region142: #{forward.1} parent=1 // pred_check
      _
    $region143: #{forward.1} parent=1 // pred_check_branch
      %1158 = sbr.rel (0) target = $region145
    $region144: #{forward.1} parent=1 // pred_region
      _
    $region145: #{forward.1} parent=1 // pred_fallthru
      _
    %1159 = vsyncpa [#allocation3], 1
    %1160 = vsyncpa [#allocation5], 1
    %1161 = vsyncpa [#allocation8], 1
    %1162 = vsyncpa [#allocation11], 1
    %1163 = vsyncpa [#allocation14], 1
    %1164 = vsyncpa [#allocation17], 1

</llo_original>
